<compile_context>
chip_gen: v7x
topology: tpu7x:2x2x1
jax: 0.10.0
libtpu: 0.0.40
codegen_flags: <defaults>
</compile_context>

<pallas_src>
import functools

import jax
import jax.numpy as jnp
from jax.experimental import pallas as pl
from jax.experimental.pallas import tpu as pltpu


def _repvggdw_kernel(xf_ref, wt_ref, bt_ref, o_ref, *, C, row_chunk):
    """Grid = (batch, row_tile).  Lane axis = fused W*C, padded to 128-multiple.

    xf_ref: (1, H_pad+8, LIN)   zero-padded input, W and C fused on lanes
                                (resident across the row-tile grid axis)
    wt_ref: (7, 7, LOUT)        folded (7x7 + padded 3x3) depthwise weights,
                                tiled W times along lanes, zero-padded, f32
    bt_ref: (1, LOUT)           folded bias, tiled along lanes, f32
    o_ref:  (1, row_chunk, LOUT)
    """
    LOUT = o_ref.shape[-1]

    # 8-aligned start of this row stripe inside the padded image.
    r0 = pl.multiple_of(pl.program_id(1) * row_chunk, 8)

    # Bias init (f32 accumulator), hoisted once per tile.
    acc = jnp.broadcast_to(bt_ref[...], (row_chunk, LOUT))

    for kx in range(7):
        # One lane-shifted slab per kx, loaded straight from the resident VMEM
        # block; extent row_chunk+8 keeps the load unmasked (8-aligned).
        xk = xf_ref[0, pl.ds(r0, row_chunk + 8),
                    kx * C: kx * C + LOUT].astype(jnp.float32)
        for ky in range(7):
            # Inner loop: cheap row slices + VALU FMA against one weight vreg.
            acc = acc + xk[ky:ky + row_chunk, :] * wt_ref[ky, kx]

    # Numerically stable SiLU: sigmoid(x) = 0.5*(tanh(x/2)+1)  (EUP tanh; no
    # exp(-x) overflow for strongly negative pre-activations).
    y = acc * (0.5 * jnp.tanh(0.5 * acc) + 0.5)
    o_ref[0, :, :] = y.astype(o_ref.dtype)


def repvggdw_forward(x_nchw, w7, b7, w3, b3):
    """x_nchw: (B, C, H, W); w7: (7,7,C); b7: (C,); w3: (3,3,C); b3: (C,)."""
    B, C, H, W = x_nchw.shape

    # Fold the 3x3 branch into the 7x7 taps (same algebra as RepVGGDW.fuse()).
    w = w7.astype(jnp.float32).at[2:5, 2:5, :].add(w3.astype(jnp.float32))
    b = (b7 + b3).astype(jnp.float32)

    # Lane-dense fused layout: lane = w*C + c, padded to a multiple of 128.
    WC = W * C
    LOUT = -(-WC // 128) * 128            # output lanes (128-multiple)
    LIN = LOUT + 6 * C                    # input lanes (covers kx shifts 0..6)

    # Row-tile size: multiple of 8, bounded by a ~40-vreg live budget
    # (acc + halo slab per lane tile), capped at 32 rows, capped by H.
    lane_tiles = LOUT // 128
    row_chunk = max(8, min(32, (160 // lane_tiles) // 8 * 8))
    row_chunk = min(row_chunk, -(-H // 8) * 8)
    n_row_tiles = -(-H // row_chunk)
    H_pad = n_row_tiles * row_chunk

    # NHWC, zero-pad spatial (3 top / 3+H_pad-H+2 bottom rows so every halo
    # slab of row_chunk+8 rows stays in-bounds and 8-aligned), fuse W,C lanes.
    x = jnp.transpose(x_nchw, (0, 2, 3, 1))                       # (B,H,W,C)
    xp = jnp.pad(x, ((0, 0), (3, 5 + H_pad - H), (3, 3), (0, 0)))  # (B,H_pad+8,W+6,C)
    xf = xp.reshape(B, H_pad + 8, (W + 6) * C)
    xf = jnp.pad(xf, ((0, 0), (0, 0), (0, LIN - (W + 6) * C)))     # (B,H_pad+8,LIN)

    # Pre-tile weights / bias along W, zero-pad lanes; cast once here.
    wt = jnp.tile(w, (1, 1, W))                                    # (7,7,WC)
    wt = jnp.pad(wt, ((0, 0), (0, 0), (0, LOUT - WC)))             # (7,7,LOUT)
    bt = jnp.pad(jnp.tile(b, (W,)), (0, LOUT - WC)).reshape(1, LOUT)

    # VMEM budget from the actual footprint (double-buffered blocks) + headroom,
    # capped at 48 MiB so v7x (64 MiB / TC) keeps pipelining headroom.
    itemsize = jnp.dtype(x_nchw.dtype).itemsize
    in_bytes = (H_pad + 8) * LIN * itemsize
    out_bytes = row_chunk * LOUT * itemsize
    par_bytes = (7 * 7 * LOUT + LOUT) * 4
    vmem_bytes = 2 * (in_bytes + out_bytes + par_bytes) + (4 << 20)
    vmem_bytes = int(min(max(vmem_bytes, 8 << 20), 48 << 20))

    kernel = functools.partial(_repvggdw_kernel, C=C, row_chunk=row_chunk)

    out_f = pl.pallas_call(
        kernel,
        out_shape=jax.ShapeDtypeStruct((B, H_pad, LOUT), x_nchw.dtype),
        grid_spec=pltpu.PrefetchScalarGridSpec(
            num_scalar_prefetch=0,
            grid=(B, n_row_tiles),
            in_specs=[
                # Whole padded image per batch element, constant along the
                # row-tile axis -> fetched once, stays VMEM-resident.
                pl.BlockSpec((1, H_pad + 8, LIN), lambda bi, ri: (bi, 0, 0)),
                pl.BlockSpec((7, 7, LOUT), lambda bi, ri: (0, 0, 0)),
                pl.BlockSpec((1, LOUT), lambda bi, ri: (0, 0)),
            ],
            out_specs=pl.BlockSpec((1, row_chunk, LOUT),
                                   lambda bi, ri: (bi, ri, 0)),
        ),
        compiler_params=pltpu.CompilerParams(
            dimension_semantics=("parallel", "parallel"),
            vmem_limit_bytes=vmem_bytes,
        ),
    )(xf, wt, bt)

    out = out_f[:, :H, :WC].reshape(B, H, W, C)
    return jnp.transpose(out, (0, 3, 1, 2))                       # back to NCHW


def _fold_bn(w_dw, gamma, beta, mean, var, eps=1e-5):
    """Fold eval-mode BatchNorm into a (bias-free) depthwise conv.

    w_dw: (k, k, C) depthwise weights (channel-last).
    Returns (w_eff (k,k,C), b_eff (C,)).
    """
    scale = gamma / jnp.sqrt(var + eps)
    w_eff = w_dw * scale[None, None, :]
    b_eff = beta - mean * scale
    return w_eff, b_eff


def make_params(ed, key):
    """Deterministic synthetic parameters matching RepVGGDW(ed).__init__ shapes.

    PyTorch shapes: conv.conv.weight (ed,1,7,7), conv1.conv.weight (ed,1,3,3),
    each followed by BatchNorm2d(ed). Here weights are stored channel-last.
    """
    ks = jax.random.split(key, 10)
    w7 = jax.random.normal(ks[0], (7, 7, ed), jnp.float32) * 0.1
    w3 = jax.random.normal(ks[1], (3, 3, ed), jnp.float32) * 0.1
    # BatchNorm parameters / running stats (eval-mode semantics).
    g7 = 1.0 + 0.1 * jax.random.normal(ks[2], (ed,), jnp.float32)
    b7 = 0.1 * jax.random.normal(ks[3], (ed,), jnp.float32)
    m7 = 0.1 * jax.random.normal(ks[4], (ed,), jnp.float32)
    v7 = 1.0 + 0.1 * jax.random.uniform(ks[5], (ed,), jnp.float32)
    g3 = 1.0 + 0.1 * jax.random.normal(ks[6], (ed,), jnp.float32)
    b3 = 0.1 * jax.random.normal(ks[7], (ed,), jnp.float32)
    m3 = 0.1 * jax.random.normal(ks[8], (ed,), jnp.float32)
    v3 = 1.0 + 0.1 * jax.random.uniform(ks[9], (ed,), jnp.float32)

    w7_eff, b7_eff = _fold_bn(w7, g7, b7, m7, v7)
    w3_eff, b3_eff = _fold_bn(w3, g3, b3, m3, v3)
    return w7_eff, b7_eff, w3_eff, b3_eff


def _reference(x_nchw, w7, b7, w3, b3):
    """Pure-JAX reference (depthwise convs via lax.conv_general_dilated)."""
    C = x_nchw.shape[1]
    k7 = w7.reshape(7, 7, 1, C)
    k3 = w3.reshape(3, 3, 1, C)
    x = jnp.transpose(x_nchw, (0, 2, 3, 1))
    dn = jax.lax.conv_dimension_numbers(x.shape, k7.shape, ("NHWC", "HWIO", "NHWC"))
    y7 = jax.lax.conv_general_dilated(x, k7, (1, 1), [(3, 3), (3, 3)],
                                      dimension_numbers=dn, feature_group_count=C) + b7
    y3 = jax.lax.conv_general_dilated(x, k3, (1, 1), [(1, 1), (1, 1)],
                                      dimension_numbers=dn, feature_group_count=C) + b3
    s = y7 + y3
    y = s * jax.nn.sigmoid(s)
    return jnp.transpose(y, (0, 3, 1, 2))


if __name__ == "__main__":
    key = jax.random.PRNGKey(0)
    k_x, k_p = jax.random.split(key)

    B, C, H, W = 2, 4, 16, 16          # ed = 4
    x = jax.random.normal(k_x, (B, C, H, W), jnp.float32)
    w7, b7, w3, b3 = make_params(C, k_p)

    out = repvggdw_forward(x, w7, b7, w3, b3)
    out = jax.block_until_ready(out)

    ref = _reference(x, w7, b7, w3, b3)
    assert out.shape == (B, C, H, W)
    assert jnp.allclose(out, ref, atol=1e-3, rtol=1e-3), float(jnp.max(jnp.abs(out - ref)))
    assert bool(jnp.all(jnp.isfinite(out)))

    print("KERNEL_OK")
</pallas_src>

<mosaic_0001>
module attributes {stable_mosaic.version = 11 : i64} {
  func.func @_repvggdw_kernel(%arg0: i32, %arg1: i32, %arg2: memref<1x24x152xf32, #tpu.memory_space<vmem>>, %arg3: memref<7x7x128xf32, #tpu.memory_space<vmem>>, %arg4: memref<1x128xf32, #tpu.memory_space<vmem>>, %arg5: memref<1x16x128xf32, #tpu.memory_space<vmem>>) attributes {dimension_semantics = [#tpu.dimension_semantics<parallel>, #tpu.dimension_semantics<parallel>], iteration_bounds = array<i64: 2, 1>, scalar_prefetch = 0 : i64, scratch_operands = 0 : i64, tpu.core_type = #tpu.core_type<tc>, window_params = [{transform_indices = @transform_0, window_bounds = array<i64: 1, 24, 152>}, {pipeline_mode = #tpu.pipeline_mode<synchronous>, transform_indices = @transform_1, window_bounds = array<i64: 7, 7, 128>}, {pipeline_mode = #tpu.pipeline_mode<synchronous>, transform_indices = @transform_2, window_bounds = array<i64: 1, 128>}, {transform_indices = @transform_3, window_bounds = array<i64: 1, 16, 128>}]} {
    %c16_i32 = arith.constant 16 : i32
    %0 = arith.muli %arg1, %c16_i32 : i32
    %1 = tpu.assume_multiple %0, 8 : i32
    %c0 = arith.constant 0 : index
    %c0_0 = arith.constant 0 : index
    %2 = vector.load %arg4[%c0, %c0_0] : memref<1x128xf32, #tpu.memory_space<vmem>>, vector<1x128xf32>
    %3 = vector.shape_cast %2 : vector<1x128xf32> to vector<1x128xf32>
    %4 = vector.broadcast %3 : vector<1x128xf32> to vector<16x128xf32>
    %c0_1 = arith.constant 0 : index
    %5 = arith.index_cast %1 : i32 to index
    %c0_2 = arith.constant 0 : index
    %6 = vector.load %arg2[%c0_1, %5, %c0_2] : memref<1x24x152xf32, #tpu.memory_space<vmem>>, vector<1x24x128xf32>
    %7 = vector.shape_cast %6 : vector<1x24x128xf32> to vector<24x128xf32>
    %8 = vector.extract_strided_slice %7 {offsets = [0, 0], sizes = [16, 128], strides = [1, 1]} : vector<24x128xf32> to vector<16x128xf32>
    %c0_3 = arith.constant 0 : index
    %c0_4 = arith.constant 0 : index
    %c0_5 = arith.constant 0 : index
    %9 = vector.load %arg3[%c0_3, %c0_4, %c0_5] : memref<7x7x128xf32, #tpu.memory_space<vmem>>, vector<1x1x128xf32>
    %10 = vector.shape_cast %9 : vector<1x1x128xf32> to vector<128xf32>
    %11 = vector.shape_cast %10 : vector<128xf32> to vector<1x128xf32>
    %12 = vector.broadcast %11 : vector<1x128xf32> to vector<16x128xf32>
    %13 = arith.mulf %8, %12 : vector<16x128xf32>
    %14 = arith.addf %4, %13 : vector<16x128xf32>
    %15 = vector.extract_strided_slice %7 {offsets = [1, 0], sizes = [16, 128], strides = [1, 1]} : vector<24x128xf32> to vector<16x128xf32>
    %c1 = arith.constant 1 : index
    %c0_6 = arith.constant 0 : index
    %c0_7 = arith.constant 0 : index
    %16 = vector.load %arg3[%c1, %c0_6, %c0_7] : memref<7x7x128xf32, #tpu.memory_space<vmem>>, vector<1x1x128xf32>
    %17 = vector.shape_cast %16 : vector<1x1x128xf32> to vector<128xf32>
    %18 = vector.shape_cast %17 : vector<128xf32> to vector<1x128xf32>
    %19 = vector.broadcast %18 : vector<1x128xf32> to vector<16x128xf32>
    %20 = arith.mulf %15, %19 : vector<16x128xf32>
    %21 = arith.addf %14, %20 : vector<16x128xf32>
    %22 = vector.extract_strided_slice %7 {offsets = [2, 0], sizes = [16, 128], strides = [1, 1]} : vector<24x128xf32> to vector<16x128xf32>
    %c2 = arith.constant 2 : index
    %c0_8 = arith.constant 0 : index
    %c0_9 = arith.constant 0 : index
    %23 = vector.load %arg3[%c2, %c0_8, %c0_9] : memref<7x7x128xf32, #tpu.memory_space<vmem>>, vector<1x1x128xf32>
    %24 = vector.shape_cast %23 : vector<1x1x128xf32> to vector<128xf32>
    %25 = vector.shape_cast %24 : vector<128xf32> to vector<1x128xf32>
    %26 = vector.broadcast %25 : vector<1x128xf32> to vector<16x128xf32>
    %27 = arith.mulf %22, %26 : vector<16x128xf32>
    %28 = arith.addf %21, %27 : vector<16x128xf32>
    %29 = vector.extract_strided_slice %7 {offsets = [3, 0], sizes = [16, 128], strides = [1, 1]} : vector<24x128xf32> to vector<16x128xf32>
    %c3 = arith.constant 3 : index
    %c0_10 = arith.constant 0 : index
    %c0_11 = arith.constant 0 : index
    %30 = vector.load %arg3[%c3, %c0_10, %c0_11] : memref<7x7x128xf32, #tpu.memory_space<vmem>>, vector<1x1x128xf32>
    %31 = vector.shape_cast %30 : vector<1x1x128xf32> to vector<128xf32>
    %32 = vector.shape_cast %31 : vector<128xf32> to vector<1x128xf32>
    %33 = vector.broadcast %32 : vector<1x128xf32> to vector<16x128xf32>
    %34 = arith.mulf %29, %33 : vector<16x128xf32>
    %35 = arith.addf %28, %34 : vector<16x128xf32>
    %36 = vector.extract_strided_slice %7 {offsets = [4, 0], sizes = [16, 128], strides = [1, 1]} : vector<24x128xf32> to vector<16x128xf32>
    %c4 = arith.constant 4 : index
    %c0_12 = arith.constant 0 : index
    %c0_13 = arith.constant 0 : index
    %37 = vector.load %arg3[%c4, %c0_12, %c0_13] : memref<7x7x128xf32, #tpu.memory_space<vmem>>, vector<1x1x128xf32>
    %38 = vector.shape_cast %37 : vector<1x1x128xf32> to vector<128xf32>
    %39 = vector.shape_cast %38 : vector<128xf32> to vector<1x128xf32>
    %40 = vector.broadcast %39 : vector<1x128xf32> to vector<16x128xf32>
    %41 = arith.mulf %36, %40 : vector<16x128xf32>
    %42 = arith.addf %35, %41 : vector<16x128xf32>
    %43 = vector.extract_strided_slice %7 {offsets = [5, 0], sizes = [16, 128], strides = [1, 1]} : vector<24x128xf32> to vector<16x128xf32>
    %c5 = arith.constant 5 : index
    %c0_14 = arith.constant 0 : index
    %c0_15 = arith.constant 0 : index
    %44 = vector.load %arg3[%c5, %c0_14, %c0_15] : memref<7x7x128xf32, #tpu.memory_space<vmem>>, vector<1x1x128xf32>
    %45 = vector.shape_cast %44 : vector<1x1x128xf32> to vector<128xf32>
    %46 = vector.shape_cast %45 : vector<128xf32> to vector<1x128xf32>
    %47 = vector.broadcast %46 : vector<1x128xf32> to vector<16x128xf32>
    %48 = arith.mulf %43, %47 : vector<16x128xf32>
    %49 = arith.addf %42, %48 : vector<16x128xf32>
    %50 = vector.extract_strided_slice %7 {offsets = [6, 0], sizes = [16, 128], strides = [1, 1]} : vector<24x128xf32> to vector<16x128xf32>
    %c6 = arith.constant 6 : index
    %c0_16 = arith.constant 0 : index
    %c0_17 = arith.constant 0 : index
    %51 = vector.load %arg3[%c6, %c0_16, %c0_17] : memref<7x7x128xf32, #tpu.memory_space<vmem>>, vector<1x1x128xf32>
    %52 = vector.shape_cast %51 : vector<1x1x128xf32> to vector<128xf32>
    %53 = vector.shape_cast %52 : vector<128xf32> to vector<1x128xf32>
    %54 = vector.broadcast %53 : vector<1x128xf32> to vector<16x128xf32>
    %55 = arith.mulf %50, %54 : vector<16x128xf32>
    %56 = arith.addf %49, %55 : vector<16x128xf32>
    %c0_18 = arith.constant 0 : index
    %57 = arith.index_cast %1 : i32 to index
    %c4_19 = arith.constant 4 : index
    %58 = vector.load %arg2[%c0_18, %57, %c4_19] : memref<1x24x152xf32, #tpu.memory_space<vmem>>, vector<1x24x128xf32>
    %59 = vector.shape_cast %58 : vector<1x24x128xf32> to vector<24x128xf32>
    %60 = vector.extract_strided_slice %59 {offsets = [0, 0], sizes = [16, 128], strides = [1, 1]} : vector<24x128xf32> to vector<16x128xf32>
    %c0_20 = arith.constant 0 : index
    %c1_21 = arith.constant 1 : index
    %c0_22 = arith.constant 0 : index
    %61 = vector.load %arg3[%c0_20, %c1_21, %c0_22] : memref<7x7x128xf32, #tpu.memory_space<vmem>>, vector<1x1x128xf32>
    %62 = vector.shape_cast %61 : vector<1x1x128xf32> to vector<128xf32>
    %63 = vector.shape_cast %62 : vector<128xf32> to vector<1x128xf32>
    %64 = vector.broadcast %63 : vector<1x128xf32> to vector<16x128xf32>
    %65 = arith.mulf %60, %64 : vector<16x128xf32>
    %66 = arith.addf %56, %65 : vector<16x128xf32>
    %67 = vector.extract_strided_slice %59 {offsets = [1, 0], sizes = [16, 128], strides = [1, 1]} : vector<24x128xf32> to vector<16x128xf32>
    %c1_23 = arith.constant 1 : index
    %c1_24 = arith.constant 1 : index
    %c0_25 = arith.constant 0 : index
    %68 = vector.load %arg3[%c1_23, %c1_24, %c0_25] : memref<7x7x128xf32, #tpu.memory_space<vmem>>, vector<1x1x128xf32>
    %69 = vector.shape_cast %68 : vector<1x1x128xf32> to vector<128xf32>
    %70 = vector.shape_cast %69 : vector<128xf32> to vector<1x128xf32>
    %71 = vector.broadcast %70 : vector<1x128xf32> to vector<16x128xf32>
    %72 = arith.mulf %67, %71 : vector<16x128xf32>
    %73 = arith.addf %66, %72 : vector<16x128xf32>
    %74 = vector.extract_strided_slice %59 {offsets = [2, 0], sizes = [16, 128], strides = [1, 1]} : vector<24x128xf32> to vector<16x128xf32>
    %c2_26 = arith.constant 2 : index
    %c1_27 = arith.constant 1 : index
    %c0_28 = arith.constant 0 : index
    %75 = vector.load %arg3[%c2_26, %c1_27, %c0_28] : memref<7x7x128xf32, #tpu.memory_space<vmem>>, vector<1x1x128xf32>
    %76 = vector.shape_cast %75 : vector<1x1x128xf32> to vector<128xf32>
    %77 = vector.shape_cast %76 : vector<128xf32> to vector<1x128xf32>
    %78 = vector.broadcast %77 : vector<1x128xf32> to vector<16x128xf32>
    %79 = arith.mulf %74, %78 : vector<16x128xf32>
    %80 = arith.addf %73, %79 : vector<16x128xf32>
    %81 = vector.extract_strided_slice %59 {offsets = [3, 0], sizes = [16, 128], strides = [1, 1]} : vector<24x128xf32> to vector<16x128xf32>
    %c3_29 = arith.constant 3 : index
    %c1_30 = arith.constant 1 : index
    %c0_31 = arith.constant 0 : index
    %82 = vector.load %arg3[%c3_29, %c1_30, %c0_31] : memref<7x7x128xf32, #tpu.memory_space<vmem>>, vector<1x1x128xf32>
    %83 = vector.shape_cast %82 : vector<1x1x128xf32> to vector<128xf32>
    %84 = vector.shape_cast %83 : vector<128xf32> to vector<1x128xf32>
    %85 = vector.broadcast %84 : vector<1x128xf32> to vector<16x128xf32>
    %86 = arith.mulf %81, %85 : vector<16x128xf32>
    %87 = arith.addf %80, %86 : vector<16x128xf32>
    %88 = vector.extract_strided_slice %59 {offsets = [4, 0], sizes = [16, 128], strides = [1, 1]} : vector<24x128xf32> to vector<16x128xf32>
    %c4_32 = arith.constant 4 : index
    %c1_33 = arith.constant 1 : index
    %c0_34 = arith.constant 0 : index
    %89 = vector.load %arg3[%c4_32, %c1_33, %c0_34] : memref<7x7x128xf32, #tpu.memory_space<vmem>>, vector<1x1x128xf32>
    %90 = vector.shape_cast %89 : vector<1x1x128xf32> to vector<128xf32>
    %91 = vector.shape_cast %90 : vector<128xf32> to vector<1x128xf32>
    %92 = vector.broadcast %91 : vector<1x128xf32> to vector<16x128xf32>
    %93 = arith.mulf %88, %92 : vector<16x128xf32>
    %94 = arith.addf %87, %93 : vector<16x128xf32>
    %95 = vector.extract_strided_slice %59 {offsets = [5, 0], sizes = [16, 128], strides = [1, 1]} : vector<24x128xf32> to vector<16x128xf32>
    %c5_35 = arith.constant 5 : index
    %c1_36 = arith.constant 1 : index
    %c0_37 = arith.constant 0 : index
    %96 = vector.load %arg3[%c5_35, %c1_36, %c0_37] : memref<7x7x128xf32, #tpu.memory_space<vmem>>, vector<1x1x128xf32>
    %97 = vector.shape_cast %96 : vector<1x1x128xf32> to vector<128xf32>
    %98 = vector.shape_cast %97 : vector<128xf32> to vector<1x128xf32>
    %99 = vector.broadcast %98 : vector<1x128xf32> to vector<16x128xf32>
    %100 = arith.mulf %95, %99 : vector<16x128xf32>
    %101 = arith.addf %94, %100 : vector<16x128xf32>
    %102 = vector.extract_strided_slice %59 {offsets = [6, 0], sizes = [16, 128], strides = [1, 1]} : vector<24x128xf32> to vector<16x128xf32>
    %c6_38 = arith.constant 6 : index
    %c1_39 = arith.constant 1 : index
    %c0_40 = arith.constant 0 : index
    %103 = vector.load %arg3[%c6_38, %c1_39, %c0_40] : memref<7x7x128xf32, #tpu.memory_space<vmem>>, vector<1x1x128xf32>
    %104 = vector.shape_cast %103 : vector<1x1x128xf32> to vector<128xf32>
    %105 = vector.shape_cast %104 : vector<128xf32> to vector<1x128xf32>
    %106 = vector.broadcast %105 : vector<1x128xf32> to vector<16x128xf32>
    %107 = arith.mulf %102, %106 : vector<16x128xf32>
    %108 = arith.addf %101, %107 : vector<16x128xf32>
    %c0_41 = arith.constant 0 : index
    %109 = arith.index_cast %1 : i32 to index
    %c8 = arith.constant 8 : index
    %110 = vector.load %arg2[%c0_41, %109, %c8] : memref<1x24x152xf32, #tpu.memory_space<vmem>>, vector<1x24x128xf32>
    %111 = vector.shape_cast %110 : vector<1x24x128xf32> to vector<24x128xf32>
    %112 = vector.extract_strided_slice %111 {offsets = [0, 0], sizes = [16, 128], strides = [1, 1]} : vector<24x128xf32> to vector<16x128xf32>
    %c0_42 = arith.constant 0 : index
    %c2_43 = arith.constant 2 : index
    %c0_44 = arith.constant 0 : index
    %113 = vector.load %arg3[%c0_42, %c2_43, %c0_44] : memref<7x7x128xf32, #tpu.memory_space<vmem>>, vector<1x1x128xf32>
    %114 = vector.shape_cast %113 : vector<1x1x128xf32> to vector<128xf32>
    %115 = vector.shape_cast %114 : vector<128xf32> to vector<1x128xf32>
    %116 = vector.broadcast %115 : vector<1x128xf32> to vector<16x128xf32>
    %117 = arith.mulf %112, %116 : vector<16x128xf32>
    %118 = arith.addf %108, %117 : vector<16x128xf32>
    %119 = vector.extract_strided_slice %111 {offsets = [1, 0], sizes = [16, 128], strides = [1, 1]} : vector<24x128xf32> to vector<16x128xf32>
    %c1_45 = arith.constant 1 : index
    %c2_46 = arith.constant 2 : index
    %c0_47 = arith.constant 0 : index
    %120 = vector.load %arg3[%c1_45, %c2_46, %c0_47] : memref<7x7x128xf32, #tpu.memory_space<vmem>>, vector<1x1x128xf32>
    %121 = vector.shape_cast %120 : vector<1x1x128xf32> to vector<128xf32>
    %122 = vector.shape_cast %121 : vector<128xf32> to vector<1x128xf32>
    %123 = vector.broadcast %122 : vector<1x128xf32> to vector<16x128xf32>
    %124 = arith.mulf %119, %123 : vector<16x128xf32>
    %125 = arith.addf %118, %124 : vector<16x128xf32>
    %126 = vector.extract_strided_slice %111 {offsets = [2, 0], sizes = [16, 128], strides = [1, 1]} : vector<24x128xf32> to vector<16x128xf32>
    %c2_48 = arith.constant 2 : index
    %c2_49 = arith.constant 2 : index
    %c0_50 = arith.constant 0 : index
    %127 = vector.load %arg3[%c2_48, %c2_49, %c0_50] : memref<7x7x128xf32, #tpu.memory_space<vmem>>, vector<1x1x128xf32>
    %128 = vector.shape_cast %127 : vector<1x1x128xf32> to vector<128xf32>
    %129 = vector.shape_cast %128 : vector<128xf32> to vector<1x128xf32>
    %130 = vector.broadcast %129 : vector<1x128xf32> to vector<16x128xf32>
    %131 = arith.mulf %126, %130 : vector<16x128xf32>
    %132 = arith.addf %125, %131 : vector<16x128xf32>
    %133 = vector.extract_strided_slice %111 {offsets = [3, 0], sizes = [16, 128], strides = [1, 1]} : vector<24x128xf32> to vector<16x128xf32>
    %c3_51 = arith.constant 3 : index
    %c2_52 = arith.constant 2 : index
    %c0_53 = arith.constant 0 : index
    %134 = vector.load %arg3[%c3_51, %c2_52, %c0_53] : memref<7x7x128xf32, #tpu.memory_space<vmem>>, vector<1x1x128xf32>
    %135 = vector.shape_cast %134 : vector<1x1x128xf32> to vector<128xf32>
    %136 = vector.shape_cast %135 : vector<128xf32> to vector<1x128xf32>
    %137 = vector.broadcast %136 : vector<1x128xf32> to vector<16x128xf32>
    %138 = arith.mulf %133, %137 : vector<16x128xf32>
    %139 = arith.addf %132, %138 : vector<16x128xf32>
    %140 = vector.extract_strided_slice %111 {offsets = [4, 0], sizes = [16, 128], strides = [1, 1]} : vector<24x128xf32> to vector<16x128xf32>
    %c4_54 = arith.constant 4 : index
    %c2_55 = arith.constant 2 : index
    %c0_56 = arith.constant 0 : index
    %141 = vector.load %arg3[%c4_54, %c2_55, %c0_56] : memref<7x7x128xf32, #tpu.memory_space<vmem>>, vector<1x1x128xf32>
    %142 = vector.shape_cast %141 : vector<1x1x128xf32> to vector<128xf32>
    %143 = vector.shape_cast %142 : vector<128xf32> to vector<1x128xf32>
    %144 = vector.broadcast %143 : vector<1x128xf32> to vector<16x128xf32>
    %145 = arith.mulf %140, %144 : vector<16x128xf32>
    %146 = arith.addf %139, %145 : vector<16x128xf32>
    %147 = vector.extract_strided_slice %111 {offsets = [5, 0], sizes = [16, 128], strides = [1, 1]} : vector<24x128xf32> to vector<16x128xf32>
    %c5_57 = arith.constant 5 : index
    %c2_58 = arith.constant 2 : index
    %c0_59 = arith.constant 0 : index
    %148 = vector.load %arg3[%c5_57, %c2_58, %c0_59] : memref<7x7x128xf32, #tpu.memory_space<vmem>>, vector<1x1x128xf32>
    %149 = vector.shape_cast %148 : vector<1x1x128xf32> to vector<128xf32>
    %150 = vector.shape_cast %149 : vector<128xf32> to vector<1x128xf32>
    %151 = vector.broadcast %150 : vector<1x128xf32> to vector<16x128xf32>
    %152 = arith.mulf %147, %151 : vector<16x128xf32>
    %153 = arith.addf %146, %152 : vector<16x128xf32>
    %154 = vector.extract_strided_slice %111 {offsets = [6, 0], sizes = [16, 128], strides = [1, 1]} : vector<24x128xf32> to vector<16x128xf32>
    %c6_60 = arith.constant 6 : index
    %c2_61 = arith.constant 2 : index
    %c0_62 = arith.constant 0 : index
    %155 = vector.load %arg3[%c6_60, %c2_61, %c0_62] : memref<7x7x128xf32, #tpu.memory_space<vmem>>, vector<1x1x128xf32>
    %156 = vector.shape_cast %155 : vector<1x1x128xf32> to vector<128xf32>
    %157 = vector.shape_cast %156 : vector<128xf32> to vector<1x128xf32>
    %158 = vector.broadcast %157 : vector<1x128xf32> to vector<16x128xf32>
    %159 = arith.mulf %154, %158 : vector<16x128xf32>
    %160 = arith.addf %153, %159 : vector<16x128xf32>
    %c0_63 = arith.constant 0 : index
    %161 = arith.index_cast %1 : i32 to index
    %c12 = arith.constant 12 : index
    %162 = vector.load %arg2[%c0_63, %161, %c12] : memref<1x24x152xf32, #tpu.memory_space<vmem>>, vector<1x24x128xf32>
    %163 = vector.shape_cast %162 : vector<1x24x128xf32> to vector<24x128xf32>
    %164 = vector.extract_strided_slice %163 {offsets = [0, 0], sizes = [16, 128], strides = [1, 1]} : vector<24x128xf32> to vector<16x128xf32>
    %c0_64 = arith.constant 0 : index
    %c3_65 = arith.constant 3 : index
    %c0_66 = arith.constant 0 : index
    %165 = vector.load %arg3[%c0_64, %c3_65, %c0_66] : memref<7x7x128xf32, #tpu.memory_space<vmem>>, vector<1x1x128xf32>
    %166 = vector.shape_cast %165 : vector<1x1x128xf32> to vector<128xf32>
    %167 = vector.shape_cast %166 : vector<128xf32> to vector<1x128xf32>
    %168 = vector.broadcast %167 : vector<1x128xf32> to vector<16x128xf32>
    %169 = arith.mulf %164, %168 : vector<16x128xf32>
    %170 = arith.addf %160, %169 : vector<16x128xf32>
    %171 = vector.extract_strided_slice %163 {offsets = [1, 0], sizes = [16, 128], strides = [1, 1]} : vector<24x128xf32> to vector<16x128xf32>
    %c1_67 = arith.constant 1 : index
    %c3_68 = arith.constant 3 : index
    %c0_69 = arith.constant 0 : index
    %172 = vector.load %arg3[%c1_67, %c3_68, %c0_69] : memref<7x7x128xf32, #tpu.memory_space<vmem>>, vector<1x1x128xf32>
    %173 = vector.shape_cast %172 : vector<1x1x128xf32> to vector<128xf32>
    %174 = vector.shape_cast %173 : vector<128xf32> to vector<1x128xf32>
    %175 = vector.broadcast %174 : vector<1x128xf32> to vector<16x128xf32>
    %176 = arith.mulf %171, %175 : vector<16x128xf32>
    %177 = arith.addf %170, %176 : vector<16x128xf32>
    %178 = vector.extract_strided_slice %163 {offsets = [2, 0], sizes = [16, 128], strides = [1, 1]} : vector<24x128xf32> to vector<16x128xf32>
    %c2_70 = arith.constant 2 : index
    %c3_71 = arith.constant 3 : index
    %c0_72 = arith.constant 0 : index
    %179 = vector.load %arg3[%c2_70, %c3_71, %c0_72] : memref<7x7x128xf32, #tpu.memory_space<vmem>>, vector<1x1x128xf32>
    %180 = vector.shape_cast %179 : vector<1x1x128xf32> to vector<128xf32>
    %181 = vector.shape_cast %180 : vector<128xf32> to vector<1x128xf32>
    %182 = vector.broadcast %181 : vector<1x128xf32> to vector<16x128xf32>
    %183 = arith.mulf %178, %182 : vector<16x128xf32>
    %184 = arith.addf %177, %183 : vector<16x128xf32>
    %185 = vector.extract_strided_slice %163 {offsets = [3, 0], sizes = [16, 128], strides = [1, 1]} : vector<24x128xf32> to vector<16x128xf32>
    %c3_73 = arith.constant 3 : index
    %c3_74 = arith.constant 3 : index
    %c0_75 = arith.constant 0 : index
    %186 = vector.load %arg3[%c3_73, %c3_74, %c0_75] : memref<7x7x128xf32, #tpu.memory_space<vmem>>, vector<1x1x128xf32>
    %187 = vector.shape_cast %186 : vector<1x1x128xf32> to vector<128xf32>
    %188 = vector.shape_cast %187 : vector<128xf32> to vector<1x128xf32>
    %189 = vector.broadcast %188 : vector<1x128xf32> to vector<16x128xf32>
    %190 = arith.mulf %185, %189 : vector<16x128xf32>
    %191 = arith.addf %184, %190 : vector<16x128xf32>
    %192 = vector.extract_strided_slice %163 {offsets = [4, 0], sizes = [16, 128], strides = [1, 1]} : vector<24x128xf32> to vector<16x128xf32>
    %c4_76 = arith.constant 4 : index
    %c3_77 = arith.constant 3 : index
    %c0_78 = arith.constant 0 : index
    %193 = vector.load %arg3[%c4_76, %c3_77, %c0_78] : memref<7x7x128xf32, #tpu.memory_space<vmem>>, vector<1x1x128xf32>
    %194 = vector.shape_cast %193 : vector<1x1x128xf32> to vector<128xf32>
    %195 = vector.shape_cast %194 : vector<128xf32> to vector<1x128xf32>
    %196 = vector.broadcast %195 : vector<1x128xf32> to vector<16x128xf32>
    %197 = arith.mulf %192, %196 : vector<16x128xf32>
    %198 = arith.addf %191, %197 : vector<16x128xf32>
    %199 = vector.extract_strided_slice %163 {offsets = [5, 0], sizes = [16, 128], strides = [1, 1]} : vector<24x128xf32> to vector<16x128xf32>
    %c5_79 = arith.constant 5 : index
    %c3_80 = arith.constant 3 : index
    %c0_81 = arith.constant 0 : index
    %200 = vector.load %arg3[%c5_79, %c3_80, %c0_81] : memref<7x7x128xf32, #tpu.memory_space<vmem>>, vector<1x1x128xf32>
    %201 = vector.shape_cast %200 : vector<1x1x128xf32> to vector<128xf32>
    %202 = vector.shape_cast %201 : vector<128xf32> to vector<1x128xf32>
    %203 = vector.broadcast %202 : vector<1x128xf32> to vector<16x128xf32>
    %204 = arith.mulf %199, %203 : vector<16x128xf32>
    %205 = arith.addf %198, %204 : vector<16x128xf32>
    %206 = vector.extract_strided_slice %163 {offsets = [6, 0], sizes = [16, 128], strides = [1, 1]} : vector<24x128xf32> to vector<16x128xf32>
    %c6_82 = arith.constant 6 : index
    %c3_83 = arith.constant 3 : index
    %c0_84 = arith.constant 0 : index
    %207 = vector.load %arg3[%c6_82, %c3_83, %c0_84] : memref<7x7x128xf32, #tpu.memory_space<vmem>>, vector<1x1x128xf32>
    %208 = vector.shape_cast %207 : vector<1x1x128xf32> to vector<128xf32>
    %209 = vector.shape_cast %208 : vector<128xf32> to vector<1x128xf32>
    %210 = vector.broadcast %209 : vector<1x128xf32> to vector<16x128xf32>
    %211 = arith.mulf %206, %210 : vector<16x128xf32>
    %212 = arith.addf %205, %211 : vector<16x128xf32>
    %c0_85 = arith.constant 0 : index
    %213 = arith.index_cast %1 : i32 to index
    %c16 = arith.constant 16 : index
    %214 = vector.load %arg2[%c0_85, %213, %c16] : memref<1x24x152xf32, #tpu.memory_space<vmem>>, vector<1x24x128xf32>
    %215 = vector.shape_cast %214 : vector<1x24x128xf32> to vector<24x128xf32>
    %216 = vector.extract_strided_slice %215 {offsets = [0, 0], sizes = [16, 128], strides = [1, 1]} : vector<24x128xf32> to vector<16x128xf32>
    %c0_86 = arith.constant 0 : index
    %c4_87 = arith.constant 4 : index
    %c0_88 = arith.constant 0 : index
    %217 = vector.load %arg3[%c0_86, %c4_87, %c0_88] : memref<7x7x128xf32, #tpu.memory_space<vmem>>, vector<1x1x128xf32>
    %218 = vector.shape_cast %217 : vector<1x1x128xf32> to vector<128xf32>
    %219 = vector.shape_cast %218 : vector<128xf32> to vector<1x128xf32>
    %220 = vector.broadcast %219 : vector<1x128xf32> to vector<16x128xf32>
    %221 = arith.mulf %216, %220 : vector<16x128xf32>
    %222 = arith.addf %212, %221 : vector<16x128xf32>
    %223 = vector.extract_strided_slice %215 {offsets = [1, 0], sizes = [16, 128], strides = [1, 1]} : vector<24x128xf32> to vector<16x128xf32>
    %c1_89 = arith.constant 1 : index
    %c4_90 = arith.constant 4 : index
    %c0_91 = arith.constant 0 : index
    %224 = vector.load %arg3[%c1_89, %c4_90, %c0_91] : memref<7x7x128xf32, #tpu.memory_space<vmem>>, vector<1x1x128xf32>
    %225 = vector.shape_cast %224 : vector<1x1x128xf32> to vector<128xf32>
    %226 = vector.shape_cast %225 : vector<128xf32> to vector<1x128xf32>
    %227 = vector.broadcast %226 : vector<1x128xf32> to vector<16x128xf32>
    %228 = arith.mulf %223, %227 : vector<16x128xf32>
    %229 = arith.addf %222, %228 : vector<16x128xf32>
    %230 = vector.extract_strided_slice %215 {offsets = [2, 0], sizes = [16, 128], strides = [1, 1]} : vector<24x128xf32> to vector<16x128xf32>
    %c2_92 = arith.constant 2 : index
    %c4_93 = arith.constant 4 : index
    %c0_94 = arith.constant 0 : index
    %231 = vector.load %arg3[%c2_92, %c4_93, %c0_94] : memref<7x7x128xf32, #tpu.memory_space<vmem>>, vector<1x1x128xf32>
    %232 = vector.shape_cast %231 : vector<1x1x128xf32> to vector<128xf32>
    %233 = vector.shape_cast %232 : vector<128xf32> to vector<1x128xf32>
    %234 = vector.broadcast %233 : vector<1x128xf32> to vector<16x128xf32>
    %235 = arith.mulf %230, %234 : vector<16x128xf32>
    %236 = arith.addf %229, %235 : vector<16x128xf32>
    %237 = vector.extract_strided_slice %215 {offsets = [3, 0], sizes = [16, 128], strides = [1, 1]} : vector<24x128xf32> to vector<16x128xf32>
    %c3_95 = arith.constant 3 : index
    %c4_96 = arith.constant 4 : index
    %c0_97 = arith.constant 0 : index
    %238 = vector.load %arg3[%c3_95, %c4_96, %c0_97] : memref<7x7x128xf32, #tpu.memory_space<vmem>>, vector<1x1x128xf32>
    %239 = vector.shape_cast %238 : vector<1x1x128xf32> to vector<128xf32>
    %240 = vector.shape_cast %239 : vector<128xf32> to vector<1x128xf32>
    %241 = vector.broadcast %240 : vector<1x128xf32> to vector<16x128xf32>
    %242 = arith.mulf %237, %241 : vector<16x128xf32>
    %243 = arith.addf %236, %242 : vector<16x128xf32>
    %244 = vector.extract_strided_slice %215 {offsets = [4, 0], sizes = [16, 128], strides = [1, 1]} : vector<24x128xf32> to vector<16x128xf32>
    %c4_98 = arith.constant 4 : index
    %c4_99 = arith.constant 4 : index
    %c0_100 = arith.constant 0 : index
    %245 = vector.load %arg3[%c4_98, %c4_99, %c0_100] : memref<7x7x128xf32, #tpu.memory_space<vmem>>, vector<1x1x128xf32>
    %246 = vector.shape_cast %245 : vector<1x1x128xf32> to vector<128xf32>
    %247 = vector.shape_cast %246 : vector<128xf32> to vector<1x128xf32>
    %248 = vector.broadcast %247 : vector<1x128xf32> to vector<16x128xf32>
    %249 = arith.mulf %244, %248 : vector<16x128xf32>
    %250 = arith.addf %243, %249 : vector<16x128xf32>
    %251 = vector.extract_strided_slice %215 {offsets = [5, 0], sizes = [16, 128], strides = [1, 1]} : vector<24x128xf32> to vector<16x128xf32>
    %c5_101 = arith.constant 5 : index
    %c4_102 = arith.constant 4 : index
    %c0_103 = arith.constant 0 : index
    %252 = vector.load %arg3[%c5_101, %c4_102, %c0_103] : memref<7x7x128xf32, #tpu.memory_space<vmem>>, vector<1x1x128xf32>
    %253 = vector.shape_cast %252 : vector<1x1x128xf32> to vector<128xf32>
    %254 = vector.shape_cast %253 : vector<128xf32> to vector<1x128xf32>
    %255 = vector.broadcast %254 : vector<1x128xf32> to vector<16x128xf32>
    %256 = arith.mulf %251, %255 : vector<16x128xf32>
    %257 = arith.addf %250, %256 : vector<16x128xf32>
    %258 = vector.extract_strided_slice %215 {offsets = [6, 0], sizes = [16, 128], strides = [1, 1]} : vector<24x128xf32> to vector<16x128xf32>
    %c6_104 = arith.constant 6 : index
    %c4_105 = arith.constant 4 : index
    %c0_106 = arith.constant 0 : index
    %259 = vector.load %arg3[%c6_104, %c4_105, %c0_106] : memref<7x7x128xf32, #tpu.memory_space<vmem>>, vector<1x1x128xf32>
    %260 = vector.shape_cast %259 : vector<1x1x128xf32> to vector<128xf32>
    %261 = vector.shape_cast %260 : vector<128xf32> to vector<1x128xf32>
    %262 = vector.broadcast %261 : vector<1x128xf32> to vector<16x128xf32>
    %263 = arith.mulf %258, %262 : vector<16x128xf32>
    %264 = arith.addf %257, %263 : vector<16x128xf32>
    %c0_107 = arith.constant 0 : index
    %265 = arith.index_cast %1 : i32 to index
    %c20 = arith.constant 20 : index
    %266 = vector.load %arg2[%c0_107, %265, %c20] : memref<1x24x152xf32, #tpu.memory_space<vmem>>, vector<1x24x128xf32>
    %267 = vector.shape_cast %266 : vector<1x24x128xf32> to vector<24x128xf32>
    %268 = vector.extract_strided_slice %267 {offsets = [0, 0], sizes = [16, 128], strides = [1, 1]} : vector<24x128xf32> to vector<16x128xf32>
    %c0_108 = arith.constant 0 : index
    %c5_109 = arith.constant 5 : index
    %c0_110 = arith.constant 0 : index
    %269 = vector.load %arg3[%c0_108, %c5_109, %c0_110] : memref<7x7x128xf32, #tpu.memory_space<vmem>>, vector<1x1x128xf32>
    %270 = vector.shape_cast %269 : vector<1x1x128xf32> to vector<128xf32>
    %271 = vector.shape_cast %270 : vector<128xf32> to vector<1x128xf32>
    %272 = vector.broadcast %271 : vector<1x128xf32> to vector<16x128xf32>
    %273 = arith.mulf %268, %272 : vector<16x128xf32>
    %274 = arith.addf %264, %273 : vector<16x128xf32>
    %275 = vector.extract_strided_slice %267 {offsets = [1, 0], sizes = [16, 128], strides = [1, 1]} : vector<24x128xf32> to vector<16x128xf32>
    %c1_111 = arith.constant 1 : index
    %c5_112 = arith.constant 5 : index
    %c0_113 = arith.constant 0 : index
    %276 = vector.load %arg3[%c1_111, %c5_112, %c0_113] : memref<7x7x128xf32, #tpu.memory_space<vmem>>, vector<1x1x128xf32>
    %277 = vector.shape_cast %276 : vector<1x1x128xf32> to vector<128xf32>
    %278 = vector.shape_cast %277 : vector<128xf32> to vector<1x128xf32>
    %279 = vector.broadcast %278 : vector<1x128xf32> to vector<16x128xf32>
    %280 = arith.mulf %275, %279 : vector<16x128xf32>
    %281 = arith.addf %274, %280 : vector<16x128xf32>
    %282 = vector.extract_strided_slice %267 {offsets = [2, 0], sizes = [16, 128], strides = [1, 1]} : vector<24x128xf32> to vector<16x128xf32>
    %c2_114 = arith.constant 2 : index
    %c5_115 = arith.constant 5 : index
    %c0_116 = arith.constant 0 : index
    %283 = vector.load %arg3[%c2_114, %c5_115, %c0_116] : memref<7x7x128xf32, #tpu.memory_space<vmem>>, vector<1x1x128xf32>
    %284 = vector.shape_cast %283 : vector<1x1x128xf32> to vector<128xf32>
    %285 = vector.shape_cast %284 : vector<128xf32> to vector<1x128xf32>
    %286 = vector.broadcast %285 : vector<1x128xf32> to vector<16x128xf32>
    %287 = arith.mulf %282, %286 : vector<16x128xf32>
    %288 = arith.addf %281, %287 : vector<16x128xf32>
    %289 = vector.extract_strided_slice %267 {offsets = [3, 0], sizes = [16, 128], strides = [1, 1]} : vector<24x128xf32> to vector<16x128xf32>
    %c3_117 = arith.constant 3 : index
    %c5_118 = arith.constant 5 : index
    %c0_119 = arith.constant 0 : index
    %290 = vector.load %arg3[%c3_117, %c5_118, %c0_119] : memref<7x7x128xf32, #tpu.memory_space<vmem>>, vector<1x1x128xf32>
    %291 = vector.shape_cast %290 : vector<1x1x128xf32> to vector<128xf32>
    %292 = vector.shape_cast %291 : vector<128xf32> to vector<1x128xf32>
    %293 = vector.broadcast %292 : vector<1x128xf32> to vector<16x128xf32>
    %294 = arith.mulf %289, %293 : vector<16x128xf32>
    %295 = arith.addf %288, %294 : vector<16x128xf32>
    %296 = vector.extract_strided_slice %267 {offsets = [4, 0], sizes = [16, 128], strides = [1, 1]} : vector<24x128xf32> to vector<16x128xf32>
    %c4_120 = arith.constant 4 : index
    %c5_121 = arith.constant 5 : index
    %c0_122 = arith.constant 0 : index
    %297 = vector.load %arg3[%c4_120, %c5_121, %c0_122] : memref<7x7x128xf32, #tpu.memory_space<vmem>>, vector<1x1x128xf32>
    %298 = vector.shape_cast %297 : vector<1x1x128xf32> to vector<128xf32>
    %299 = vector.shape_cast %298 : vector<128xf32> to vector<1x128xf32>
    %300 = vector.broadcast %299 : vector<1x128xf32> to vector<16x128xf32>
    %301 = arith.mulf %296, %300 : vector<16x128xf32>
    %302 = arith.addf %295, %301 : vector<16x128xf32>
    %303 = vector.extract_strided_slice %267 {offsets = [5, 0], sizes = [16, 128], strides = [1, 1]} : vector<24x128xf32> to vector<16x128xf32>
    %c5_123 = arith.constant 5 : index
    %c5_124 = arith.constant 5 : index
    %c0_125 = arith.constant 0 : index
    %304 = vector.load %arg3[%c5_123, %c5_124, %c0_125] : memref<7x7x128xf32, #tpu.memory_space<vmem>>, vector<1x1x128xf32>
    %305 = vector.shape_cast %304 : vector<1x1x128xf32> to vector<128xf32>
    %306 = vector.shape_cast %305 : vector<128xf32> to vector<1x128xf32>
    %307 = vector.broadcast %306 : vector<1x128xf32> to vector<16x128xf32>
    %308 = arith.mulf %303, %307 : vector<16x128xf32>
    %309 = arith.addf %302, %308 : vector<16x128xf32>
    %310 = vector.extract_strided_slice %267 {offsets = [6, 0], sizes = [16, 128], strides = [1, 1]} : vector<24x128xf32> to vector<16x128xf32>
    %c6_126 = arith.constant 6 : index
    %c5_127 = arith.constant 5 : index
    %c0_128 = arith.constant 0 : index
    %311 = vector.load %arg3[%c6_126, %c5_127, %c0_128] : memref<7x7x128xf32, #tpu.memory_space<vmem>>, vector<1x1x128xf32>
    %312 = vector.shape_cast %311 : vector<1x1x128xf32> to vector<128xf32>
    %313 = vector.shape_cast %312 : vector<128xf32> to vector<1x128xf32>
    %314 = vector.broadcast %313 : vector<1x128xf32> to vector<16x128xf32>
    %315 = arith.mulf %310, %314 : vector<16x128xf32>
    %316 = arith.addf %309, %315 : vector<16x128xf32>
    %c0_129 = arith.constant 0 : index
    %317 = arith.index_cast %1 : i32 to index
    %c24 = arith.constant 24 : index
    %318 = vector.load %arg2[%c0_129, %317, %c24] : memref<1x24x152xf32, #tpu.memory_space<vmem>>, vector<1x24x128xf32>
    %319 = vector.shape_cast %318 : vector<1x24x128xf32> to vector<24x128xf32>
    %320 = vector.extract_strided_slice %319 {offsets = [0, 0], sizes = [16, 128], strides = [1, 1]} : vector<24x128xf32> to vector<16x128xf32>
    %c0_130 = arith.constant 0 : index
    %c6_131 = arith.constant 6 : index
    %c0_132 = arith.constant 0 : index
    %321 = vector.load %arg3[%c0_130, %c6_131, %c0_132] : memref<7x7x128xf32, #tpu.memory_space<vmem>>, vector<1x1x128xf32>
    %322 = vector.shape_cast %321 : vector<1x1x128xf32> to vector<128xf32>
    %323 = vector.shape_cast %322 : vector<128xf32> to vector<1x128xf32>
    %324 = vector.broadcast %323 : vector<1x128xf32> to vector<16x128xf32>
    %325 = arith.mulf %320, %324 : vector<16x128xf32>
    %326 = arith.addf %316, %325 : vector<16x128xf32>
    %327 = vector.extract_strided_slice %319 {offsets = [1, 0], sizes = [16, 128], strides = [1, 1]} : vector<24x128xf32> to vector<16x128xf32>
    %c1_133 = arith.constant 1 : index
    %c6_134 = arith.constant 6 : index
    %c0_135 = arith.constant 0 : index
    %328 = vector.load %arg3[%c1_133, %c6_134, %c0_135] : memref<7x7x128xf32, #tpu.memory_space<vmem>>, vector<1x1x128xf32>
    %329 = vector.shape_cast %328 : vector<1x1x128xf32> to vector<128xf32>
    %330 = vector.shape_cast %329 : vector<128xf32> to vector<1x128xf32>
    %331 = vector.broadcast %330 : vector<1x128xf32> to vector<16x128xf32>
    %332 = arith.mulf %327, %331 : vector<16x128xf32>
    %333 = arith.addf %326, %332 : vector<16x128xf32>
    %334 = vector.extract_strided_slice %319 {offsets = [2, 0], sizes = [16, 128], strides = [1, 1]} : vector<24x128xf32> to vector<16x128xf32>
    %c2_136 = arith.constant 2 : index
    %c6_137 = arith.constant 6 : index
    %c0_138 = arith.constant 0 : index
    %335 = vector.load %arg3[%c2_136, %c6_137, %c0_138] : memref<7x7x128xf32, #tpu.memory_space<vmem>>, vector<1x1x128xf32>
    %336 = vector.shape_cast %335 : vector<1x1x128xf32> to vector<128xf32>
    %337 = vector.shape_cast %336 : vector<128xf32> to vector<1x128xf32>
    %338 = vector.broadcast %337 : vector<1x128xf32> to vector<16x128xf32>
    %339 = arith.mulf %334, %338 : vector<16x128xf32>
    %340 = arith.addf %333, %339 : vector<16x128xf32>
    %341 = vector.extract_strided_slice %319 {offsets = [3, 0], sizes = [16, 128], strides = [1, 1]} : vector<24x128xf32> to vector<16x128xf32>
    %c3_139 = arith.constant 3 : index
    %c6_140 = arith.constant 6 : index
    %c0_141 = arith.constant 0 : index
    %342 = vector.load %arg3[%c3_139, %c6_140, %c0_141] : memref<7x7x128xf32, #tpu.memory_space<vmem>>, vector<1x1x128xf32>
    %343 = vector.shape_cast %342 : vector<1x1x128xf32> to vector<128xf32>
    %344 = vector.shape_cast %343 : vector<128xf32> to vector<1x128xf32>
    %345 = vector.broadcast %344 : vector<1x128xf32> to vector<16x128xf32>
    %346 = arith.mulf %341, %345 : vector<16x128xf32>
    %347 = arith.addf %340, %346 : vector<16x128xf32>
    %348 = vector.extract_strided_slice %319 {offsets = [4, 0], sizes = [16, 128], strides = [1, 1]} : vector<24x128xf32> to vector<16x128xf32>
    %c4_142 = arith.constant 4 : index
    %c6_143 = arith.constant 6 : index
    %c0_144 = arith.constant 0 : index
    %349 = vector.load %arg3[%c4_142, %c6_143, %c0_144] : memref<7x7x128xf32, #tpu.memory_space<vmem>>, vector<1x1x128xf32>
    %350 = vector.shape_cast %349 : vector<1x1x128xf32> to vector<128xf32>
    %351 = vector.shape_cast %350 : vector<128xf32> to vector<1x128xf32>
    %352 = vector.broadcast %351 : vector<1x128xf32> to vector<16x128xf32>
    %353 = arith.mulf %348, %352 : vector<16x128xf32>
    %354 = arith.addf %347, %353 : vector<16x128xf32>
    %355 = vector.extract_strided_slice %319 {offsets = [5, 0], sizes = [16, 128], strides = [1, 1]} : vector<24x128xf32> to vector<16x128xf32>
    %c5_145 = arith.constant 5 : index
    %c6_146 = arith.constant 6 : index
    %c0_147 = arith.constant 0 : index
    %356 = vector.load %arg3[%c5_145, %c6_146, %c0_147] : memref<7x7x128xf32, #tpu.memory_space<vmem>>, vector<1x1x128xf32>
    %357 = vector.shape_cast %356 : vector<1x1x128xf32> to vector<128xf32>
    %358 = vector.shape_cast %357 : vector<128xf32> to vector<1x128xf32>
    %359 = vector.broadcast %358 : vector<1x128xf32> to vector<16x128xf32>
    %360 = arith.mulf %355, %359 : vector<16x128xf32>
    %361 = arith.addf %354, %360 : vector<16x128xf32>
    %362 = vector.extract_strided_slice %319 {offsets = [6, 0], sizes = [16, 128], strides = [1, 1]} : vector<24x128xf32> to vector<16x128xf32>
    %c6_148 = arith.constant 6 : index
    %c6_149 = arith.constant 6 : index
    %c0_150 = arith.constant 0 : index
    %363 = vector.load %arg3[%c6_148, %c6_149, %c0_150] : memref<7x7x128xf32, #tpu.memory_space<vmem>>, vector<1x1x128xf32>
    %364 = vector.shape_cast %363 : vector<1x1x128xf32> to vector<128xf32>
    %365 = vector.shape_cast %364 : vector<128xf32> to vector<1x128xf32>
    %366 = vector.broadcast %365 : vector<1x128xf32> to vector<16x128xf32>
    %367 = arith.mulf %362, %366 : vector<16x128xf32>
    %368 = arith.addf %361, %367 : vector<16x128xf32>
    %cst = arith.constant 5.000000e-01 : f32
    %369 = vector.broadcast %cst : f32 to vector<16x128xf32>
    %370 = arith.mulf %369, %368 : vector<16x128xf32>
    %371 = math.tanh %370 : vector<16x128xf32>
    %cst_151 = arith.constant 5.000000e-01 : f32
    %372 = vector.broadcast %cst_151 : f32 to vector<16x128xf32>
    %373 = arith.mulf %372, %371 : vector<16x128xf32>
    %cst_152 = arith.constant 5.000000e-01 : f32
    %374 = vector.broadcast %cst_152 : f32 to vector<16x128xf32>
    %375 = arith.addf %373, %374 : vector<16x128xf32>
    %376 = arith.mulf %368, %375 : vector<16x128xf32>
    %c0_153 = arith.constant 0 : index
    %c0_154 = arith.constant 0 : index
    %c0_155 = arith.constant 0 : index
    %377 = vector.load %arg5[%c0_153, %c0_154, %c0_155] : memref<1x16x128xf32, #tpu.memory_space<vmem>>, vector<1x16x128xf32>
    %378 = vector.shape_cast %377 : vector<1x16x128xf32> to vector<16x128xf32>
    %379 = vector.shape_cast %376 : vector<16x128xf32> to vector<1x16x128xf32>
    tpu.vector_store %arg5[%c0_153, %c0_154, %c0_155], %379 {strides = array<i32>} : memref<1x16x128xf32, #tpu.memory_space<vmem>>, vector<1x16x128xf32>,
    return
  }
  func.func @transform_0(%arg0: i32, %arg1: i32) -> (i32, i32, i32) {
    %c0_i32 = arith.constant 0 : i32
    %c0_i32_0 = arith.constant 0 : i32
    %c0_i32_1 = arith.constant 0 : i32
    return %arg0, %c0_i32, %c0_i32_0 : i32, i32, i32
  }
  func.func @transform_1(%arg0: i32, %arg1: i32) -> (i32, i32, i32) {
    %c0_i32 = arith.constant 0 : i32
    %c0_i32_0 = arith.constant 0 : i32
    %c0_i32_1 = arith.constant 0 : i32
    %c0_i32_2 = arith.constant 0 : i32
    return %c0_i32, %c0_i32_0, %c0_i32_1 : i32, i32, i32
  }
  func.func @transform_2(%arg0: i32, %arg1: i32) -> (i32, i32) {
    %c0_i32 = arith.constant 0 : i32
    %c0_i32_0 = arith.constant 0 : i32
    %c0_i32_1 = arith.constant 0 : i32
    return %c0_i32, %c0_i32_0 : i32, i32
  }
  func.func @transform_3(%arg0: i32, %arg1: i32) -> (i32, i32, i32) {
    %c0_i32 = arith.constant 0 : i32
    %c0_i32_0 = arith.constant 0 : i32
    return %arg0, %arg1, %c0_i32 : i32, i32, i32
  }
}

</mosaic_0001>

<llo_original>
// kernel: tpu_custom_call.1
$region0: #{tpu_custom_call.1}
  #allocation0 [shape = 'u32[]', space=smem, size = 0x4, offset = 0x4, fixed_abs, tag = 'smem constant byte address 0x4 - core index']
  #allocation1 [shape = 'u32[144,128]{1,0:T(1,128)}', space=vmem, size = 0x12000, scoped, tag = 'internal scratch']
  %s0 = inlined_call_operand.hbm [shape: f32[2,24,152], index: 0, kind: input, shape index: {}]
  %s1 = inlined_call_operand.hbm [shape: f32[7,7,128], index: 1, kind: input, shape index: {}]
  %s2 = inlined_call_operand.vmem [shape: f32[1,128], index: 2, kind: input, shape index: {}]
  %s3 = inlined_call_operand.hbm [shape: f32[2,16,128], index: 3, kind: output, shape index: {}]
  %s4 = sld [smem:[#allocation0]]
  $region53: #{tpu_custom_call.1} parent=0
    _
  %s6 = ssub.s32 1, %s4
  %s7 = scalar_select 0, %s6, %s4
  $region1: #{tpu_custom_call.1} parent=0
    #allocation2 [shape = 'u8[49152]{0}', space=vmem, size = 0xc000, scoped, tag = 'input window, operand 0']
    #allocation3 [shape = 's32[2]{0}', space=sflag, size = 0x8, scoped, tag = 'scoped memory for tpu_custom_call.1']
    #allocation4 [shape = 's32[2]{0}', space=sflag, size = 0x8, scoped, tag = 'scoped memory for tpu_custom_call.1']
    #allocation5 [shape = 'u8[28672]{0}', space=vmem, size = 0x7000, scoped, tag = 'input window, operand 1, single buffered']
    #allocation6 [shape = 's32[1]{0}', space=sflag, size = 0x4, scoped, tag = 'scoped memory for tpu_custom_call.1']
    #allocation7 [shape = 'u8[16384]{0}', space=vmem, size = 0x4000, scoped, tag = 'output window, operand 0']
    %8 = vsyncpa [#allocation3], 0
    %s9 = scalar_lea.sflag [#allocation3], 1
    %10 = vsyncpa %s9, 0
    %11 = vsyncpa [#allocation6], 0
    %12 = vsyncpa [#allocation4], 0
    %s13 = scalar_lea.sflag [#allocation4], 1
    %14 = vsyncpa %s13, 0
    loop: start=0, step=1, limit=4
    $region2: #{tpu_custom_call.1} parent=1 // loop_pre_header
      _
    $region3: #{tpu_custom_call.1} parent=1 // loop_header
      %s16 = sphi 0, %s20
      %p17 = scmp.ge.s32.totalorder %s16, 4
      %s23 = sphi 0, %s35
      %s24 = sphi 0, %s31
      %s25 = sphi 0, %s23
      %s26 = sphi 0, %s24
      %s27 = sphi 0, %s25
      %s28 = sphi 0, %s26
      %s38 = sphi 0, %s40
      %s41 = sphi 0, %s38
      %s42 = sphi 0, %s41
      %s58 = sphi 0, %s42
      %s62 = sphi 0, %s62
      %s64 = sphi 0, %s62
      %s65 = sphi 0, %s64
      %s79 = sphi 0, %s65
      %s83 = sphi 0, %s83
      %s85 = sphi 0, %s83
      %s86 = sphi 0, %s85
      %s100 = sphi 0, %s86
      %s108 = sphi 0, %s110
      %s111 = sphi 0, %s108
      %s112 = sphi 0, %s111
      %s128 = sphi 0, %s112
    $region4: #{tpu_custom_call.1} parent=1 // loop_header_branch
      %19 = sbr.rel (%p17) target = $region8
    $region5: #{tpu_custom_call.1} parent=1 // loop_body
      %s21 = ssub.s32 %s16, 1
      %s22 = ssub.s32 %s16, 2
      %s29 = sadd.s32 1, %s24
      %p30 = scmp.ge.s32.totalorder %s29, 1
      %s31 = scalar_select %p30, 0, %s29
      %s32 = sadd.s32 1, %s23
      %s33 = scalar_select %p30, %s32, %s23
      %p34 = scmp.ge.s32.totalorder %s33, 2
      %s35 = scalar_select %p34, 0, %s33
      %s36 = ssub.s32 %s23, %s35
      %p37 = scmp.eq.s32.totalorder %s36, 0
      %s39 = sadd.s32 %s38, 1
      %s40 = scalar_select %p37, %s38, %s39
      %p43 = pneg %p37
      %p44 = scmp.eq.s32.totalorder %s16, 1
      %p45 = por %p43, %p44
      %p46 = scmp.ne.s32.totalorder %s38, %s41
      %p47 = scmp.eq.s32.totalorder %s16, 0
      %p48 = por %p46, %p47
      %p49 = scmp.ne.s32.totalorder %s38, %s41
      %p50 = scmp.eq.s32.totalorder %s21, 1
      %p51 = por %p49, %p50
      %p52 = scmp.ne.s32.totalorder %s41, %s42
      %p53 = scmp.eq.s32.totalorder %s21, 0
      %p54 = por %p52, %p53
      %p55 = scmp.ne.s32.totalorder %s41, %s42
      %p56 = scmp.eq.s32.totalorder %s22, 1
      %p57 = por %p55, %p56
      %p59 = scmp.ne.s32.totalorder %s42, %s58
      %p60 = scmp.eq.s32.totalorder %s22, 0
      %p61 = por %p59, %p60
      %s63 = sadd.s32 %s62, 1
      %p66 = scmp.eq.s32.totalorder %s16, 1
      %p67 = scmp.ne.s32.totalorder %s62, %s64
      %p68 = scmp.eq.s32.totalorder %s16, 0
      %p69 = por %p67, %p68
      %p70 = scmp.ne.s32.totalorder %s62, %s64
      %p71 = scmp.eq.s32.totalorder %s21, 1
      %p72 = por %p70, %p71
      %p73 = scmp.ne.s32.totalorder %s64, %s65
      %p74 = scmp.eq.s32.totalorder %s21, 0
      %p75 = por %p73, %p74
      %p76 = scmp.ne.s32.totalorder %s64, %s65
      %p77 = scmp.eq.s32.totalorder %s22, 1
      %p78 = por %p76, %p77
      %p80 = scmp.ne.s32.totalorder %s65, %s79
      %p81 = scmp.eq.s32.totalorder %s22, 0
      %p82 = por %p80, %p81
      %s84 = sadd.s32 %s83, 1
      %p87 = scmp.eq.s32.totalorder %s16, 1
      %p88 = scmp.ne.s32.totalorder %s83, %s85
      %p89 = scmp.eq.s32.totalorder %s16, 0
      %p90 = por %p88, %p89
      %p91 = scmp.ne.s32.totalorder %s83, %s85
      %p92 = scmp.eq.s32.totalorder %s21, 1
      %p93 = por %p91, %p92
      %p94 = scmp.ne.s32.totalorder %s85, %s86
      %p95 = scmp.eq.s32.totalorder %s21, 0
      %p96 = por %p94, %p95
      %p97 = scmp.ne.s32.totalorder %s85, %s86
      %p98 = scmp.eq.s32.totalorder %s22, 1
      %p99 = por %p97, %p98
      %p101 = scmp.ne.s32.totalorder %s86, %s100
      %p102 = scmp.eq.s32.totalorder %s22, 0
      %p103 = por %p101, %p102
      %s104 = ssub.s32 %s23, %s35
      %s105 = ssub.s32 %s24, %s31
      %s106 = sor.u32 %s104, %s105
      %p107 = scmp.eq.s32.totalorder %s106, 0
      %s109 = sadd.s32 %s108, 1
      %s110 = scalar_select %p107, %s108, %s109
      %p113 = pneg %p107
      %p114 = scmp.eq.s32.totalorder %s16, 1
      %p115 = por %p113, %p114
      %p116 = scmp.ne.s32.totalorder %s108, %s111
      %p117 = scmp.eq.s32.totalorder %s16, 0
      %p118 = por %p116, %p117
      %p119 = scmp.ne.s32.totalorder %s108, %s111
      %p120 = scmp.eq.s32.totalorder %s21, 1
      %p121 = por %p119, %p120
      %p122 = scmp.ne.s32.totalorder %s111, %s112
      %p123 = scmp.eq.s32.totalorder %s21, 0
      %p124 = por %p122, %p123
      %p125 = scmp.ne.s32.totalorder %s111, %s112
      %p126 = scmp.eq.s32.totalorder %s22, 1
      %p127 = por %p125, %p126
      %p129 = scmp.ne.s32.totalorder %s112, %s128
      %p130 = scmp.eq.s32.totalorder %s22, 0
      %p131 = por %p129, %p130
      %p132 = scmp.le.s32.totalorder 1, %s16
      %p133 = scmp.lt.s32.totalorder %s16, 3
      %p134 = pnand %p132, %p133
      %p135 = pneg %p134
      // Predicated region
      $region9: #{tpu_custom_call.1} parent=5 // pred_check
        _
      $region10: #{tpu_custom_call.1} parent=5 // pred_check_branch
        %137 = sbr.rel (%p134) target = $region12
      $region11: #{tpu_custom_call.1} parent=5 // pred_region
        %s138 = ssub.s32 %s16, 1
        // Predicated region
        $region13: #{tpu_custom_call.1} parent=11 // pred_check
          %p139 = pneg %p75
        $region14: #{tpu_custom_call.1} parent=11 // pred_check_branch
          %141 = sbr.rel (%p139) target = $region16
        $region15: #{tpu_custom_call.1} parent=11 // pred_region
          %s143 = ssub.s32 896, 896
          %144 = vsyncadd [#allocation6], %s143
          %s145 = sshll.u32 [#allocation5], 4
          %s146 = int_to_ptr.vmem [resolvable:$true] %s145
          %151 = dma.hbm_to_vmem [thread:$0]  %s1, 896, %s146, [#allocation6], 128, 128, 8
        $region16: #{tpu_custom_call.1} parent=11 // pred_fallthru
          _
        // Predicated region
        $region17: #{tpu_custom_call.1} parent=11 // pred_check
          %p152 = pneg %p96
        $region18: #{tpu_custom_call.1} parent=11 // pred_check_branch
          %154 = sbr.rel (%p152) target = $region20
        $region19: #{tpu_custom_call.1} parent=11 // pred_region
          _
        $region20: #{tpu_custom_call.1} parent=11 // pred_fallthru
          _
      $region12: #{tpu_custom_call.1} parent=5 // pred_fallthru
        _
      %p155 = scmp.lt.s32.totalorder %s16, 2
      // Predicated region
      $region21: #{tpu_custom_call.1} parent=5 // pred_check
        %p156 = pneg %p155
      $region22: #{tpu_custom_call.1} parent=5 // pred_check_branch
        %158 = sbr.rel (%p156) target = $region24
      $region23: #{tpu_custom_call.1} parent=5 // pred_region
        // Predicated region
        $region25: #{tpu_custom_call.1} parent=23 // pred_check
          %p159 = pneg %p48
        $region26: #{tpu_custom_call.1} parent=23 // pred_check_branch
          %161 = sbr.rel (%p159) target = $region28
        $region27: #{tpu_custom_call.1} parent=23 // pred_region
          %s162 = sand.u32 %s38, 1
          %s163 = scalar_lea.sflag [#allocation3], %s162
          %s164 = sand.u32 %s38, 1
          %s165 = smul.addr %s164, 48
          %s166 = scalar_lea.vmem [#allocation2], %s165
          %s168 = ssub.s32 768, 768
          %169 = vsyncadd %s163, %s168
          %s170 = smul.addr %s23, 6
          %s171 = smul.addr %s170, 128
          %s172 = scalar_lea.hbm %s0, %s171
          %s173 = sshll.u32 %s166, 4
          %s174 = int_to_ptr.vmem [resolvable:$true] %s173
          %179 = dma.hbm_to_vmem [thread:$0]  %s172, 768, %s174, %s163, 256, 256, 16
        $region28: #{tpu_custom_call.1} parent=23 // pred_fallthru
          _
      $region24: #{tpu_custom_call.1} parent=5 // pred_fallthru
        _
      %p180 = scmp.le.s32.totalorder 1, %s16
      %p181 = scmp.lt.s32.totalorder %s16, 3
      %p182 = pnand %p180, %p181
      %p183 = pneg %p182
      // Predicated region
      $region29: #{tpu_custom_call.1} parent=5 // pred_check
        _
      $region30: #{tpu_custom_call.1} parent=5 // pred_check_branch
        %185 = sbr.rel (%p182) target = $region32
      $region31: #{tpu_custom_call.1} parent=5 // pred_region
        %s186 = ssub.s32 %s16, 1
        %s187 = sand.u32 %s41, 1
        %s188 = scalar_lea.sflag [#allocation3], %s187
        %s189 = sand.u32 %s41, 1
        %s190 = smul.addr %s189, 48
        %s191 = scalar_lea.vmem [#allocation2], %s190
        // Predicated region
        $region33: #{tpu_custom_call.1} parent=31 // pred_check
          %p192 = pneg %p54
        $region34: #{tpu_custom_call.1} parent=31 // pred_check_branch
          %194 = sbr.rel (%p192) target = $region36
        $region35: #{tpu_custom_call.1} parent=31 // pred_region
          %195 = dma.done %s188, 768
        $region36: #{tpu_custom_call.1} parent=31 // pred_fallthru
          _
        // Predicated region
        $region37: #{tpu_custom_call.1} parent=31 // pred_check
          %p196 = pneg %p75
        $region38: #{tpu_custom_call.1} parent=31 // pred_check_branch
          %198 = sbr.rel (%p196) target = $region40
        $region39: #{tpu_custom_call.1} parent=31 // pred_region
          %199 = dma.done [#allocation6], 896
        $region40: #{tpu_custom_call.1} parent=31 // pred_fallthru
          _
        %s200 = sand.u32 %s41, 1
        %s201 = scalar_lea.sflag [#allocation3], %s200
        %s202 = sand.u32 %s41, 1
        %s203 = smul.addr %s202, 48
        %s204 = scalar_lea.vmem [#allocation2], %s203
        %p205 = pneg %p54
        %p206 = pneg %p51
        %p207 = pneg %p75
        %p208 = pneg %p72
        %p209 = pneg %p96
        %p210 = pneg %p93
        %p211 = pneg %p124
        %p212 = pneg %p121
        %s213 = sand.u32 %s111, 1
        %s214 = scalar_lea.sflag [#allocation4], %s213
        %s215 = sand.u32 %s111, 1
        %s216 = smul.addr %s215, 16
        %s217 = scalar_lea.vmem [#allocation7], %s216
        %s218 = smul.u32 2, %s26
        %s219 = smul.u32 %s26, 16
        %v220 = vld [vmem:[%s2] sm:$0x1]
        %v222 = vlaneseq
        %v223 = vshrl.u32 %v222, 7
        %v224 = vsub.s32 0, %v223
        %v225 = vrot.slane %v220, %v224
        %s227 = sshra.s32 %s219, 3
        %s228 = sand.u32 %s219, 7
        %s229 = smul.u32 %s227, 2
        %s230 = smul.addr %s229, 8
        %s231 = scalar_lea.vmem %s191, %s230 [#allocation2]
        %v232 = vld [vmem:[%s231] sm:$0xff]
        %v233 = vld [vmem:[%s231 + $0x10] sm:$0xff]
        %v234 = vld [vmem:[%s231 + $0x20] sm:$0xff]
        %v235 = vld [vmem:[#allocation5] sm:$0x1]
        %v236 = vlaneseq
        %v237 = vshrl.u32 %v236, 7
        %v238 = vsub.s32 0, %v237
        %v239 = vrot.slane %v235, %v238
        %v240 = vmul.f32 %v232, %v239
        %v241 = vmul.f32 %v233, %v239
        %v242 = vadd.f32 %v225, %v240
        %v243 = vadd.f32 %v225, %v241
        %s244 = scalar_lea.vmem [#allocation5], 8
        %v245 = vld [vmem:[%s244] sm:$0x1]
        %v246 = vlaneseq
        %v247 = vshrl.u32 %v246, 7
        %v248 = vsub.s32 0, %v247
        %v249 = vrot.slane %v245, %v248
        %v250 = vmul.f32 %v232, %v249
        %v251 = vmul.f32 %v233, %v249
        %v252 = vmul.f32 %v234, %v249
        %vm256 = vcmask 1046528
        %v257 = vrot.slane %v250, 1
        %v258 = vrot.slane %v251, 1
        %v259 = vsel %vm256, %v257, %v258
        %v260 = vrot.slane %v252, 1
        %v261 = vsel %vm256, %v258, %v260
        %v264 = vadd.f32 %v242, %v259
        %v265 = vadd.f32 %v243, %v261
        %s266 = scalar_lea.vmem [#allocation5], 16
        %v267 = vld [vmem:[%s266] sm:$0x1]
        %v268 = vlaneseq
        %v269 = vshrl.u32 %v268, 7
        %v270 = vsub.s32 0, %v269
        %v271 = vrot.slane %v267, %v270
        %v272 = vmul.f32 %v232, %v271
        %v273 = vmul.f32 %v233, %v271
        %v274 = vmul.f32 %v234, %v271
        %vm278 = vcmask 1045504
        %v279 = vrot.slane %v272, 2
        %v280 = vrot.slane %v273, 2
        %v281 = vsel %vm278, %v279, %v280
        %v282 = vrot.slane %v274, 2
        %v283 = vsel %vm278, %v280, %v282
        %v286 = vadd.f32 %v264, %v281
        %v287 = vadd.f32 %v265, %v283
        %s288 = scalar_lea.vmem [#allocation5], 24
        %v289 = vld [vmem:[%s288] sm:$0x1]
        %v290 = vlaneseq
        %v291 = vshrl.u32 %v290, 7
        %v292 = vsub.s32 0, %v291
        %v293 = vrot.slane %v289, %v292
        %v294 = vmul.f32 %v232, %v293
        %v295 = vmul.f32 %v233, %v293
        %v296 = vmul.f32 %v234, %v293
        %vm300 = vcmask 1044480
        %v301 = vrot.slane %v294, 3
        %v302 = vrot.slane %v295, 3
        %v303 = vsel %vm300, %v301, %v302
        %v304 = vrot.slane %v296, 3
        %v305 = vsel %vm300, %v302, %v304
        %v308 = vadd.f32 %v286, %v303
        %v309 = vadd.f32 %v287, %v305
        %s310 = scalar_lea.vmem [#allocation5], 32
        %v311 = vld [vmem:[%s310] sm:$0x1]
        %v312 = vlaneseq
        %v313 = vshrl.u32 %v312, 7
        %v314 = vsub.s32 0, %v313
        %v315 = vrot.slane %v311, %v314
        %v316 = vmul.f32 %v232, %v315
        %v317 = vmul.f32 %v233, %v315
        %v318 = vmul.f32 %v234, %v315
        %vm322 = vcmask 1043456
        %v323 = vrot.slane %v316, 4
        %v324 = vrot.slane %v317, 4
        %v325 = vsel %vm322, %v323, %v324
        %v326 = vrot.slane %v318, 4
        %v327 = vsel %vm322, %v324, %v326
        %v330 = vadd.f32 %v308, %v325
        %v331 = vadd.f32 %v309, %v327
        %s332 = scalar_lea.vmem [#allocation5], 40
        %v333 = vld [vmem:[%s332] sm:$0x1]
        %v334 = vlaneseq
        %v335 = vshrl.u32 %v334, 7
        %v336 = vsub.s32 0, %v335
        %v337 = vrot.slane %v333, %v336
        %v338 = vmul.f32 %v232, %v337
        %v339 = vmul.f32 %v233, %v337
        %v340 = vmul.f32 %v234, %v337
        %vm344 = vcmask 1042432
        %v345 = vrot.slane %v338, 5
        %v346 = vrot.slane %v339, 5
        %v347 = vsel %vm344, %v345, %v346
        %v348 = vrot.slane %v340, 5
        %v349 = vsel %vm344, %v346, %v348
        %v352 = vadd.f32 %v330, %v347
        %v353 = vadd.f32 %v331, %v349
        %s354 = scalar_lea.vmem [#allocation5], 48
        %v355 = vld [vmem:[%s354] sm:$0x1]
        %v356 = vlaneseq
        %v357 = vshrl.u32 %v356, 7
        %v358 = vsub.s32 0, %v357
        %v359 = vrot.slane %v355, %v358
        %v360 = vmul.f32 %v232, %v359
        %v361 = vmul.f32 %v233, %v359
        %v362 = vmul.f32 %v234, %v359
        %vm366 = vcmask 1041408
        %v367 = vrot.slane %v360, 6
        %v368 = vrot.slane %v361, 6
        %v369 = vsel %vm366, %v367, %v368
        %v370 = vrot.slane %v362, 6
        %v371 = vsel %vm366, %v368, %v370
        %v374 = vadd.f32 %v352, %v369
        %v375 = vadd.f32 %v353, %v371
        %v376 = vld [vmem:[%s231 + $0x8] sm:$0xff]
        %v377 = vld [vmem:[%s231 + $0x18] sm:$0xff]
        %v378 = vld [vmem:[%s231 + $0x28] sm:$0xff]
        %v379 = vld [vmem:[#allocation5 + $0x1] sm:$0x1]
        %v380 = vlaneseq
        %v381 = vshrl.u32 %v380, 7
        %v382 = vsub.s32 0, %v381
        %v383 = vrot.slane %v379, %v382
        %385 = vrot.lane.b32.xlu0 %v383, 4
        %v386 = vpop.permute.xlu0 %385
        %v388 = vmul.f32 %v232, %v386
        %v389 = vmul.f32 %v376, %v386
        %v390 = vmul.f32 %v233, %v386
        %v391 = vmul.f32 %v377, %v386
        %396 = vrot.lane.b32.xlu0 %v388, 124
        %v397 = vpop.permute.xlu0 %396
        %398 = vrot.lane.b32.xlu0 %v389, 124
        %v399 = vpop.permute.xlu0 %398
        %400 = vrot.lane.b32.xlu0 %v390, 124
        %v401 = vpop.permute.xlu0 %400
        %402 = vrot.lane.b32.xlu0 %v391, 124
        %v403 = vpop.permute.xlu0 %402
        %vm404 = vcmask 1014784
        %v405 = vsel %vm404, %v397, %v399
        %v406 = vsel %vm404, %v401, %v403
        %v409 = vadd.f32 %v374, %v405
        %v410 = vadd.f32 %v375, %v406
        %v411 = vld [vmem:[%s244 + $0x1] sm:$0x1]
        %v412 = vlaneseq
        %v413 = vshrl.u32 %v412, 7
        %v414 = vsub.s32 0, %v413
        %v415 = vrot.slane %v411, %v414
        %417 = vrot.lane.b32.xlu0 %v415, 4
        %v418 = vpop.permute.xlu0 %417
        %v420 = vmul.f32 %v232, %v418
        %v421 = vmul.f32 %v376, %v418
        %v422 = vmul.f32 %v233, %v418
        %v423 = vmul.f32 %v377, %v418
        %v424 = vmul.f32 %v234, %v418
        %v425 = vmul.f32 %v378, %v418
        %v432 = vrot.slane %v420, 1
        %v433 = vrot.slane %v422, 1
        %v434 = vsel %vm256, %v432, %v433
        %v435 = vrot.slane %v421, 1
        %v436 = vrot.slane %v423, 1
        %v437 = vsel %vm256, %v435, %v436
        %v438 = vrot.slane %v424, 1
        %v439 = vsel %vm256, %v433, %v438
        %v440 = vrot.slane %v425, 1
        %v441 = vsel %vm256, %v436, %v440
        %442 = vrot.lane.b32.xlu0 %v434, 124
        %v443 = vpop.permute.xlu0 %442
        %444 = vrot.lane.b32.xlu0 %v437, 124
        %v445 = vpop.permute.xlu0 %444
        %446 = vrot.lane.b32.xlu0 %v439, 124
        %v447 = vpop.permute.xlu0 %446
        %448 = vrot.lane.b32.xlu0 %v441, 124
        %v449 = vpop.permute.xlu0 %448
        %v450 = vsel %vm404, %v443, %v445
        %v451 = vsel %vm404, %v447, %v449
        %v454 = vadd.f32 %v409, %v450
        %v455 = vadd.f32 %v410, %v451
        %v456 = vld [vmem:[%s266 + $0x1] sm:$0x1]
        %v457 = vlaneseq
        %v458 = vshrl.u32 %v457, 7
        %v459 = vsub.s32 0, %v458
        %v460 = vrot.slane %v456, %v459
        %462 = vrot.lane.b32.xlu0 %v460, 4
        %v463 = vpop.permute.xlu0 %462
        %v465 = vmul.f32 %v232, %v463
        %v466 = vmul.f32 %v376, %v463
        %v467 = vmul.f32 %v233, %v463
        %v468 = vmul.f32 %v377, %v463
        %v469 = vmul.f32 %v234, %v463
        %v470 = vmul.f32 %v378, %v463
        %v477 = vrot.slane %v465, 2
        %v478 = vrot.slane %v467, 2
        %v479 = vsel %vm278, %v477, %v478
        %v480 = vrot.slane %v466, 2
        %v481 = vrot.slane %v468, 2
        %v482 = vsel %vm278, %v480, %v481
        %v483 = vrot.slane %v469, 2
        %v484 = vsel %vm278, %v478, %v483
        %v485 = vrot.slane %v470, 2
        %v486 = vsel %vm278, %v481, %v485
        %487 = vrot.lane.b32.xlu0 %v479, 124
        %v488 = vpop.permute.xlu0 %487
        %489 = vrot.lane.b32.xlu0 %v482, 124
        %v490 = vpop.permute.xlu0 %489
        %491 = vrot.lane.b32.xlu0 %v484, 124
        %v492 = vpop.permute.xlu0 %491
        %493 = vrot.lane.b32.xlu0 %v486, 124
        %v494 = vpop.permute.xlu0 %493
        %v495 = vsel %vm404, %v488, %v490
        %v496 = vsel %vm404, %v492, %v494
        %v499 = vadd.f32 %v454, %v495
        %v500 = vadd.f32 %v455, %v496
        %v501 = vld [vmem:[%s288 + $0x1] sm:$0x1]
        %v502 = vlaneseq
        %v503 = vshrl.u32 %v502, 7
        %v504 = vsub.s32 0, %v503
        %v505 = vrot.slane %v501, %v504
        %507 = vrot.lane.b32.xlu0 %v505, 4
        %v508 = vpop.permute.xlu0 %507
        %v510 = vmul.f32 %v232, %v508
        %v511 = vmul.f32 %v376, %v508
        %v512 = vmul.f32 %v233, %v508
        %v513 = vmul.f32 %v377, %v508
        %v514 = vmul.f32 %v234, %v508
        %v515 = vmul.f32 %v378, %v508
        %v522 = vrot.slane %v510, 3
        %v523 = vrot.slane %v512, 3
        %v524 = vsel %vm300, %v522, %v523
        %v525 = vrot.slane %v511, 3
        %v526 = vrot.slane %v513, 3
        %v527 = vsel %vm300, %v525, %v526
        %v528 = vrot.slane %v514, 3
        %v529 = vsel %vm300, %v523, %v528
        %v530 = vrot.slane %v515, 3
        %v531 = vsel %vm300, %v526, %v530
        %532 = vrot.lane.b32.xlu0 %v524, 124
        %v533 = vpop.permute.xlu0 %532
        %534 = vrot.lane.b32.xlu0 %v527, 124
        %v535 = vpop.permute.xlu0 %534
        %536 = vrot.lane.b32.xlu0 %v529, 124
        %v537 = vpop.permute.xlu0 %536
        %538 = vrot.lane.b32.xlu0 %v531, 124
        %v539 = vpop.permute.xlu0 %538
        %v540 = vsel %vm404, %v533, %v535
        %v541 = vsel %vm404, %v537, %v539
        %v544 = vadd.f32 %v499, %v540
        %v545 = vadd.f32 %v500, %v541
        %v546 = vld [vmem:[%s310 + $0x1] sm:$0x1]
        %v547 = vlaneseq
        %v548 = vshrl.u32 %v547, 7
        %v549 = vsub.s32 0, %v548
        %v550 = vrot.slane %v546, %v549
        %552 = vrot.lane.b32.xlu0 %v550, 4
        %v553 = vpop.permute.xlu0 %552
        %v555 = vmul.f32 %v232, %v553
        %v556 = vmul.f32 %v376, %v553
        %v557 = vmul.f32 %v233, %v553
        %v558 = vmul.f32 %v377, %v553
        %v559 = vmul.f32 %v234, %v553
        %v560 = vmul.f32 %v378, %v553
        %v567 = vrot.slane %v555, 4
        %v568 = vrot.slane %v557, 4
        %v569 = vsel %vm322, %v567, %v568
        %v570 = vrot.slane %v556, 4
        %v571 = vrot.slane %v558, 4
        %v572 = vsel %vm322, %v570, %v571
        %v573 = vrot.slane %v559, 4
        %v574 = vsel %vm322, %v568, %v573
        %v575 = vrot.slane %v560, 4
        %v576 = vsel %vm322, %v571, %v575
        %577 = vrot.lane.b32.xlu0 %v569, 124
        %v578 = vpop.permute.xlu0 %577
        %579 = vrot.lane.b32.xlu0 %v572, 124
        %v580 = vpop.permute.xlu0 %579
        %581 = vrot.lane.b32.xlu0 %v574, 124
        %v582 = vpop.permute.xlu0 %581
        %583 = vrot.lane.b32.xlu0 %v576, 124
        %v584 = vpop.permute.xlu0 %583
        %v585 = vsel %vm404, %v578, %v580
        %v586 = vsel %vm404, %v582, %v584
        %v589 = vadd.f32 %v544, %v585
        %v590 = vadd.f32 %v545, %v586
        %v591 = vld [vmem:[%s332 + $0x1] sm:$0x1]
        %v592 = vlaneseq
        %v593 = vshrl.u32 %v592, 7
        %v594 = vsub.s32 0, %v593
        %v595 = vrot.slane %v591, %v594
        %597 = vrot.lane.b32.xlu0 %v595, 4
        %v598 = vpop.permute.xlu0 %597
        %v600 = vmul.f32 %v232, %v598
        %v601 = vmul.f32 %v376, %v598
        %v602 = vmul.f32 %v233, %v598
        %v603 = vmul.f32 %v377, %v598
        %v604 = vmul.f32 %v234, %v598
        %v605 = vmul.f32 %v378, %v598
        %v612 = vrot.slane %v600, 5
        %v613 = vrot.slane %v602, 5
        %v614 = vsel %vm344, %v612, %v613
        %v615 = vrot.slane %v601, 5
        %v616 = vrot.slane %v603, 5
        %v617 = vsel %vm344, %v615, %v616
        %v618 = vrot.slane %v604, 5
        %v619 = vsel %vm344, %v613, %v618
        %v620 = vrot.slane %v605, 5
        %v621 = vsel %vm344, %v616, %v620
        %622 = vrot.lane.b32.xlu0 %v614, 124
        %v623 = vpop.permute.xlu0 %622
        %624 = vrot.lane.b32.xlu0 %v617, 124
        %v625 = vpop.permute.xlu0 %624
        %626 = vrot.lane.b32.xlu0 %v619, 124
        %v627 = vpop.permute.xlu0 %626
        %628 = vrot.lane.b32.xlu0 %v621, 124
        %v629 = vpop.permute.xlu0 %628
        %v630 = vsel %vm404, %v623, %v625
        %v631 = vsel %vm404, %v627, %v629
        %v634 = vadd.f32 %v589, %v630
        %v635 = vadd.f32 %v590, %v631
        %v636 = vld [vmem:[%s354 + $0x1] sm:$0x1]
        %v637 = vlaneseq
        %v638 = vshrl.u32 %v637, 7
        %v639 = vsub.s32 0, %v638
        %v640 = vrot.slane %v636, %v639
        %642 = vrot.lane.b32.xlu0 %v640, 4
        %v643 = vpop.permute.xlu0 %642
        %v645 = vmul.f32 %v232, %v643
        %v646 = vmul.f32 %v376, %v643
        %v647 = vmul.f32 %v233, %v643
        %v648 = vmul.f32 %v377, %v643
        %v649 = vmul.f32 %v234, %v643
        %v650 = vmul.f32 %v378, %v643
        %v657 = vrot.slane %v645, 6
        %v658 = vrot.slane %v647, 6
        %v659 = vsel %vm366, %v657, %v658
        %v660 = vrot.slane %v646, 6
        %v661 = vrot.slane %v648, 6
        %v662 = vsel %vm366, %v660, %v661
        %v663 = vrot.slane %v649, 6
        %v664 = vsel %vm366, %v658, %v663
        %v665 = vrot.slane %v650, 6
        %v666 = vsel %vm366, %v661, %v665
        %667 = vrot.lane.b32.xlu0 %v659, 124
        %v668 = vpop.permute.xlu0 %667
        %669 = vrot.lane.b32.xlu0 %v662, 124
        %v670 = vpop.permute.xlu0 %669
        %671 = vrot.lane.b32.xlu0 %v664, 124
        %v672 = vpop.permute.xlu0 %671
        %673 = vrot.lane.b32.xlu0 %v666, 124
        %v674 = vpop.permute.xlu0 %673
        %v675 = vsel %vm404, %v668, %v670
        %v676 = vsel %vm404, %v672, %v674
        %v679 = vadd.f32 %v634, %v675
        %v680 = vadd.f32 %v635, %v676
        %v681 = vld [vmem:[#allocation5 + $0x2] sm:$0x1]
        %v682 = vlaneseq
        %v683 = vshrl.u32 %v682, 7
        %v684 = vsub.s32 0, %v683
        %v685 = vrot.slane %v681, %v684
        %687 = vrot.lane.b32.xlu0 %v685, 8
        %v688 = vpop.permute.xlu0 %687
        %v690 = vmul.f32 %v232, %v688
        %v691 = vmul.f32 %v376, %v688
        %v692 = vmul.f32 %v233, %v688
        %v693 = vmul.f32 %v377, %v688
        %698 = vrot.lane.b32.xlu0 %v690, 120
        %v699 = vpop.permute.xlu0 %698
        %700 = vrot.lane.b32.xlu0 %v691, 120
        %v701 = vpop.permute.xlu0 %700
        %702 = vrot.lane.b32.xlu0 %v692, 120
        %v703 = vpop.permute.xlu0 %702
        %704 = vrot.lane.b32.xlu0 %v693, 120
        %v705 = vpop.permute.xlu0 %704
        %vm706 = vcmask 982016
        %v707 = vsel %vm706, %v699, %v701
        %v708 = vsel %vm706, %v703, %v705
        %v711 = vadd.f32 %v679, %v707
        %v712 = vadd.f32 %v680, %v708
        %v713 = vld [vmem:[%s244 + $0x2] sm:$0x1]
        %v714 = vlaneseq
        %v715 = vshrl.u32 %v714, 7
        %v716 = vsub.s32 0, %v715
        %v717 = vrot.slane %v713, %v716
        %719 = vrot.lane.b32.xlu0 %v717, 8
        %v720 = vpop.permute.xlu0 %719
        %v722 = vmul.f32 %v232, %v720
        %v723 = vmul.f32 %v376, %v720
        %v724 = vmul.f32 %v233, %v720
        %v725 = vmul.f32 %v377, %v720
        %v726 = vmul.f32 %v234, %v720
        %v727 = vmul.f32 %v378, %v720
        %v734 = vrot.slane %v722, 1
        %v735 = vrot.slane %v724, 1
        %v736 = vsel %vm256, %v734, %v735
        %v737 = vrot.slane %v723, 1
        %v738 = vrot.slane %v725, 1
        %v739 = vsel %vm256, %v737, %v738
        %v740 = vrot.slane %v726, 1
        %v741 = vsel %vm256, %v735, %v740
        %v742 = vrot.slane %v727, 1
        %v743 = vsel %vm256, %v738, %v742
        %744 = vrot.lane.b32.xlu0 %v736, 120
        %v745 = vpop.permute.xlu0 %744
        %746 = vrot.lane.b32.xlu0 %v739, 120
        %v747 = vpop.permute.xlu0 %746
        %748 = vrot.lane.b32.xlu0 %v741, 120
        %v749 = vpop.permute.xlu0 %748
        %750 = vrot.lane.b32.xlu0 %v743, 120
        %v751 = vpop.permute.xlu0 %750
        %v752 = vsel %vm706, %v745, %v747
        %v753 = vsel %vm706, %v749, %v751
        %v756 = vadd.f32 %v711, %v752
        %v757 = vadd.f32 %v712, %v753
        %v758 = vld [vmem:[%s266 + $0x2] sm:$0x1]
        %v759 = vlaneseq
        %v760 = vshrl.u32 %v759, 7
        %v761 = vsub.s32 0, %v760
        %v762 = vrot.slane %v758, %v761
        %764 = vrot.lane.b32.xlu0 %v762, 8
        %v765 = vpop.permute.xlu0 %764
        %v767 = vmul.f32 %v232, %v765
        %v768 = vmul.f32 %v376, %v765
        %v769 = vmul.f32 %v233, %v765
        %v770 = vmul.f32 %v377, %v765
        %v771 = vmul.f32 %v234, %v765
        %v772 = vmul.f32 %v378, %v765
        %v779 = vrot.slane %v767, 2
        %v780 = vrot.slane %v769, 2
        %v781 = vsel %vm278, %v779, %v780
        %v782 = vrot.slane %v768, 2
        %v783 = vrot.slane %v770, 2
        %v784 = vsel %vm278, %v782, %v783
        %v785 = vrot.slane %v771, 2
        %v786 = vsel %vm278, %v780, %v785
        %v787 = vrot.slane %v772, 2
        %v788 = vsel %vm278, %v783, %v787
        %789 = vrot.lane.b32.xlu0 %v781, 120
        %v790 = vpop.permute.xlu0 %789
        %791 = vrot.lane.b32.xlu0 %v784, 120
        %v792 = vpop.permute.xlu0 %791
        %793 = vrot.lane.b32.xlu0 %v786, 120
        %v794 = vpop.permute.xlu0 %793
        %795 = vrot.lane.b32.xlu0 %v788, 120
        %v796 = vpop.permute.xlu0 %795
        %v797 = vsel %vm706, %v790, %v792
        %v798 = vsel %vm706, %v794, %v796
        %v801 = vadd.f32 %v756, %v797
        %v802 = vadd.f32 %v757, %v798
        %v803 = vld [vmem:[%s288 + $0x2] sm:$0x1]
        %v804 = vlaneseq
        %v805 = vshrl.u32 %v804, 7
        %v806 = vsub.s32 0, %v805
        %v807 = vrot.slane %v803, %v806
        %809 = vrot.lane.b32.xlu0 %v807, 8
        %v810 = vpop.permute.xlu0 %809
        %v812 = vmul.f32 %v232, %v810
        %v813 = vmul.f32 %v376, %v810
        %v814 = vmul.f32 %v233, %v810
        %v815 = vmul.f32 %v377, %v810
        %v816 = vmul.f32 %v234, %v810
        %v817 = vmul.f32 %v378, %v810
        %v824 = vrot.slane %v812, 3
        %v825 = vrot.slane %v814, 3
        %v826 = vsel %vm300, %v824, %v825
        %v827 = vrot.slane %v813, 3
        %v828 = vrot.slane %v815, 3
        %v829 = vsel %vm300, %v827, %v828
        %v830 = vrot.slane %v816, 3
        %v831 = vsel %vm300, %v825, %v830
        %v832 = vrot.slane %v817, 3
        %v833 = vsel %vm300, %v828, %v832
        %834 = vrot.lane.b32.xlu0 %v826, 120
        %v835 = vpop.permute.xlu0 %834
        %836 = vrot.lane.b32.xlu0 %v829, 120
        %v837 = vpop.permute.xlu0 %836
        %838 = vrot.lane.b32.xlu0 %v831, 120
        %v839 = vpop.permute.xlu0 %838
        %840 = vrot.lane.b32.xlu0 %v833, 120
        %v841 = vpop.permute.xlu0 %840
        %v842 = vsel %vm706, %v835, %v837
        %v843 = vsel %vm706, %v839, %v841
        %v846 = vadd.f32 %v801, %v842
        %v847 = vadd.f32 %v802, %v843
        %v848 = vld [vmem:[%s310 + $0x2] sm:$0x1]
        %v849 = vlaneseq
        %v850 = vshrl.u32 %v849, 7
        %v851 = vsub.s32 0, %v850
        %v852 = vrot.slane %v848, %v851
        %854 = vrot.lane.b32.xlu0 %v852, 8
        %v855 = vpop.permute.xlu0 %854
        %v857 = vmul.f32 %v232, %v855
        %v858 = vmul.f32 %v376, %v855
        %v859 = vmul.f32 %v233, %v855
        %v860 = vmul.f32 %v377, %v855
        %v861 = vmul.f32 %v234, %v855
        %v862 = vmul.f32 %v378, %v855
        %v869 = vrot.slane %v857, 4
        %v870 = vrot.slane %v859, 4
        %v871 = vsel %vm322, %v869, %v870
        %v872 = vrot.slane %v858, 4
        %v873 = vrot.slane %v860, 4
        %v874 = vsel %vm322, %v872, %v873
        %v875 = vrot.slane %v861, 4
        %v876 = vsel %vm322, %v870, %v875
        %v877 = vrot.slane %v862, 4
        %v878 = vsel %vm322, %v873, %v877
        %879 = vrot.lane.b32.xlu0 %v871, 120
        %v880 = vpop.permute.xlu0 %879
        %881 = vrot.lane.b32.xlu0 %v874, 120
        %v882 = vpop.permute.xlu0 %881
        %883 = vrot.lane.b32.xlu0 %v876, 120
        %v884 = vpop.permute.xlu0 %883
        %885 = vrot.lane.b32.xlu0 %v878, 120
        %v886 = vpop.permute.xlu0 %885
        %v887 = vsel %vm706, %v880, %v882
        %v888 = vsel %vm706, %v884, %v886
        %v891 = vadd.f32 %v846, %v887
        %v892 = vadd.f32 %v847, %v888
        %v893 = vld [vmem:[%s332 + $0x2] sm:$0x1]
        %v894 = vlaneseq
        %v895 = vshrl.u32 %v894, 7
        %v896 = vsub.s32 0, %v895
        %v897 = vrot.slane %v893, %v896
        %899 = vrot.lane.b32.xlu0 %v897, 8
        %v900 = vpop.permute.xlu0 %899
        %v902 = vmul.f32 %v232, %v900
        %v903 = vmul.f32 %v376, %v900
        %v904 = vmul.f32 %v233, %v900
        %v905 = vmul.f32 %v377, %v900
        %v906 = vmul.f32 %v234, %v900
        %v907 = vmul.f32 %v378, %v900
        %v914 = vrot.slane %v902, 5
        %v915 = vrot.slane %v904, 5
        %v916 = vsel %vm344, %v914, %v915
        %v917 = vrot.slane %v903, 5
        %v918 = vrot.slane %v905, 5
        %v919 = vsel %vm344, %v917, %v918
        %v920 = vrot.slane %v906, 5
        %v921 = vsel %vm344, %v915, %v920
        %v922 = vrot.slane %v907, 5
        %v923 = vsel %vm344, %v918, %v922
        %924 = vrot.lane.b32.xlu0 %v916, 120
        %v925 = vpop.permute.xlu0 %924
        %926 = vrot.lane.b32.xlu0 %v919, 120
        %v927 = vpop.permute.xlu0 %926
        %928 = vrot.lane.b32.xlu0 %v921, 120
        %v929 = vpop.permute.xlu0 %928
        %930 = vrot.lane.b32.xlu0 %v923, 120
        %v931 = vpop.permute.xlu0 %930
        %v932 = vsel %vm706, %v925, %v927
        %v933 = vsel %vm706, %v929, %v931
        %v936 = vadd.f32 %v891, %v932
        %v937 = vadd.f32 %v892, %v933
        %v938 = vld [vmem:[%s354 + $0x2] sm:$0x1]
        %v939 = vlaneseq
        %v940 = vshrl.u32 %v939, 7
        %v941 = vsub.s32 0, %v940
        %v942 = vrot.slane %v938, %v941
        %944 = vrot.lane.b32.xlu0 %v942, 8
        %v945 = vpop.permute.xlu0 %944
        %v947 = vmul.f32 %v232, %v945
        %v948 = vmul.f32 %v376, %v945
        %v949 = vmul.f32 %v233, %v945
        %v950 = vmul.f32 %v377, %v945
        %v951 = vmul.f32 %v234, %v945
        %v952 = vmul.f32 %v378, %v945
        %v959 = vrot.slane %v947, 6
        %v960 = vrot.slane %v949, 6
        %v961 = vsel %vm366, %v959, %v960
        %v962 = vrot.slane %v948, 6
        %v963 = vrot.slane %v950, 6
        %v964 = vsel %vm366, %v962, %v963
        %v965 = vrot.slane %v951, 6
        %v966 = vsel %vm366, %v960, %v965
        %v967 = vrot.slane %v952, 6
        %v968 = vsel %vm366, %v963, %v967
        %969 = vrot.lane.b32.xlu0 %v961, 120
        %v970 = vpop.permute.xlu0 %969
        %971 = vrot.lane.b32.xlu0 %v964, 120
        %v972 = vpop.permute.xlu0 %971
        %973 = vrot.lane.b32.xlu0 %v966, 120
        %v974 = vpop.permute.xlu0 %973
        %975 = vrot.lane.b32.xlu0 %v968, 120
        %v976 = vpop.permute.xlu0 %975
        %v977 = vsel %vm706, %v970, %v972
        %v978 = vsel %vm706, %v974, %v976
        %v981 = vadd.f32 %v936, %v977
        %v982 = vadd.f32 %v937, %v978
        %v983 = vld [vmem:[#allocation5 + $0x3] sm:$0x1]
        %v984 = vlaneseq
        %v985 = vshrl.u32 %v984, 7
        %v986 = vsub.s32 0, %v985
        %v987 = vrot.slane %v983, %v986
        %989 = vrot.lane.b32.xlu0 %v987, 12
        %v990 = vpop.permute.xlu0 %989
        %v992 = vmul.f32 %v232, %v990
        %v993 = vmul.f32 %v376, %v990
        %v994 = vmul.f32 %v233, %v990
        %v995 = vmul.f32 %v377, %v990
        %1000 = vrot.lane.b32.xlu0 %v992, 116
        %v1001 = vpop.permute.xlu0 %1000
        %1002 = vrot.lane.b32.xlu0 %v993, 116
        %v1003 = vpop.permute.xlu0 %1002
        %1004 = vrot.lane.b32.xlu0 %v994, 116
        %v1005 = vpop.permute.xlu0 %1004
        %1006 = vrot.lane.b32.xlu0 %v995, 116
        %v1007 = vpop.permute.xlu0 %1006
        %vm1008 = vcmask 949248
        %v1009 = vsel %vm1008, %v1001, %v1003
        %v1010 = vsel %vm1008, %v1005, %v1007
        %v1013 = vadd.f32 %v981, %v1009
        %v1014 = vadd.f32 %v982, %v1010
        %v1015 = vld [vmem:[%s244 + $0x3] sm:$0x1]
        %v1016 = vlaneseq
        %v1017 = vshrl.u32 %v1016, 7
        %v1018 = vsub.s32 0, %v1017
        %v1019 = vrot.slane %v1015, %v1018
        %1021 = vrot.lane.b32.xlu0 %v1019, 12
        %v1022 = vpop.permute.xlu0 %1021
        %v1024 = vmul.f32 %v232, %v1022
        %v1025 = vmul.f32 %v376, %v1022
        %v1026 = vmul.f32 %v233, %v1022
        %v1027 = vmul.f32 %v377, %v1022
        %v1028 = vmul.f32 %v234, %v1022
        %v1029 = vmul.f32 %v378, %v1022
        %v1036 = vrot.slane %v1024, 1
        %v1037 = vrot.slane %v1026, 1
        %v1038 = vsel %vm256, %v1036, %v1037
        %v1039 = vrot.slane %v1025, 1
        %v1040 = vrot.slane %v1027, 1
        %v1041 = vsel %vm256, %v1039, %v1040
        %v1042 = vrot.slane %v1028, 1
        %v1043 = vsel %vm256, %v1037, %v1042
        %v1044 = vrot.slane %v1029, 1
        %v1045 = vsel %vm256, %v1040, %v1044
        %1046 = vrot.lane.b32.xlu0 %v1038, 116
        %v1047 = vpop.permute.xlu0 %1046
        %1048 = vrot.lane.b32.xlu0 %v1041, 116
        %v1049 = vpop.permute.xlu0 %1048
        %1050 = vrot.lane.b32.xlu0 %v1043, 116
        %v1051 = vpop.permute.xlu0 %1050
        %1052 = vrot.lane.b32.xlu0 %v1045, 116
        %v1053 = vpop.permute.xlu0 %1052
        %v1054 = vsel %vm1008, %v1047, %v1049
        %v1055 = vsel %vm1008, %v1051, %v1053
        %v1058 = vadd.f32 %v1013, %v1054
        %v1059 = vadd.f32 %v1014, %v1055
        %v1060 = vld [vmem:[%s266 + $0x3] sm:$0x1]
        %v1061 = vlaneseq
        %v1062 = vshrl.u32 %v1061, 7
        %v1063 = vsub.s32 0, %v1062
        %v1064 = vrot.slane %v1060, %v1063
        %1066 = vrot.lane.b32.xlu0 %v1064, 12
        %v1067 = vpop.permute.xlu0 %1066
        %v1069 = vmul.f32 %v232, %v1067
        %v1070 = vmul.f32 %v376, %v1067
        %v1071 = vmul.f32 %v233, %v1067
        %v1072 = vmul.f32 %v377, %v1067
        %v1073 = vmul.f32 %v234, %v1067
        %v1074 = vmul.f32 %v378, %v1067
        %v1081 = vrot.slane %v1069, 2
        %v1082 = vrot.slane %v1071, 2
        %v1083 = vsel %vm278, %v1081, %v1082
        %v1084 = vrot.slane %v1070, 2
        %v1085 = vrot.slane %v1072, 2
        %v1086 = vsel %vm278, %v1084, %v1085
        %v1087 = vrot.slane %v1073, 2
        %v1088 = vsel %vm278, %v1082, %v1087
        %v1089 = vrot.slane %v1074, 2
        %v1090 = vsel %vm278, %v1085, %v1089
        %1091 = vrot.lane.b32.xlu0 %v1083, 116
        %v1092 = vpop.permute.xlu0 %1091
        %1093 = vrot.lane.b32.xlu0 %v1086, 116
        %v1094 = vpop.permute.xlu0 %1093
        %1095 = vrot.lane.b32.xlu0 %v1088, 116
        %v1096 = vpop.permute.xlu0 %1095
        %1097 = vrot.lane.b32.xlu0 %v1090, 116
        %v1098 = vpop.permute.xlu0 %1097
        %v1099 = vsel %vm1008, %v1092, %v1094
        %v1100 = vsel %vm1008, %v1096, %v1098
        %v1103 = vadd.f32 %v1058, %v1099
        %v1104 = vadd.f32 %v1059, %v1100
        %v1105 = vld [vmem:[%s288 + $0x3] sm:$0x1]
        %v1106 = vlaneseq
        %v1107 = vshrl.u32 %v1106, 7
        %v1108 = vsub.s32 0, %v1107
        %v1109 = vrot.slane %v1105, %v1108
        %1111 = vrot.lane.b32.xlu0 %v1109, 12
        %v1112 = vpop.permute.xlu0 %1111
        %v1114 = vmul.f32 %v232, %v1112
        %v1115 = vmul.f32 %v376, %v1112
        %v1116 = vmul.f32 %v233, %v1112
        %v1117 = vmul.f32 %v377, %v1112
        %v1118 = vmul.f32 %v234, %v1112
        %v1119 = vmul.f32 %v378, %v1112
        %v1126 = vrot.slane %v1114, 3
        %v1127 = vrot.slane %v1116, 3
        %v1128 = vsel %vm300, %v1126, %v1127
        %v1129 = vrot.slane %v1115, 3
        %v1130 = vrot.slane %v1117, 3
        %v1131 = vsel %vm300, %v1129, %v1130
        %v1132 = vrot.slane %v1118, 3
        %v1133 = vsel %vm300, %v1127, %v1132
        %v1134 = vrot.slane %v1119, 3
        %v1135 = vsel %vm300, %v1130, %v1134
        %1136 = vrot.lane.b32.xlu0 %v1128, 116
        %v1137 = vpop.permute.xlu0 %1136
        %1138 = vrot.lane.b32.xlu0 %v1131, 116
        %v1139 = vpop.permute.xlu0 %1138
        %1140 = vrot.lane.b32.xlu0 %v1133, 116
        %v1141 = vpop.permute.xlu0 %1140
        %1142 = vrot.lane.b32.xlu0 %v1135, 116
        %v1143 = vpop.permute.xlu0 %1142
        %v1144 = vsel %vm1008, %v1137, %v1139
        %v1145 = vsel %vm1008, %v1141, %v1143
        %v1148 = vadd.f32 %v1103, %v1144
        %v1149 = vadd.f32 %v1104, %v1145
        %v1150 = vld [vmem:[%s310 + $0x3] sm:$0x1]
        %v1151 = vlaneseq
        %v1152 = vshrl.u32 %v1151, 7
        %v1153 = vsub.s32 0, %v1152
        %v1154 = vrot.slane %v1150, %v1153
        %1156 = vrot.lane.b32.xlu0 %v1154, 12
        %v1157 = vpop.permute.xlu0 %1156
        %v1159 = vmul.f32 %v232, %v1157
        %v1160 = vmul.f32 %v376, %v1157
        %v1161 = vmul.f32 %v233, %v1157
        %v1162 = vmul.f32 %v377, %v1157
        %v1163 = vmul.f32 %v234, %v1157
        %v1164 = vmul.f32 %v378, %v1157
        %v1171 = vrot.slane %v1159, 4
        %v1172 = vrot.slane %v1161, 4
        %v1173 = vsel %vm322, %v1171, %v1172
        %v1174 = vrot.slane %v1160, 4
        %v1175 = vrot.slane %v1162, 4
        %v1176 = vsel %vm322, %v1174, %v1175
        %v1177 = vrot.slane %v1163, 4
        %v1178 = vsel %vm322, %v1172, %v1177
        %v1179 = vrot.slane %v1164, 4
        %v1180 = vsel %vm322, %v1175, %v1179
        %1181 = vrot.lane.b32.xlu0 %v1173, 116
        %v1182 = vpop.permute.xlu0 %1181
        %1183 = vrot.lane.b32.xlu0 %v1176, 116
        %v1184 = vpop.permute.xlu0 %1183
        %1185 = vrot.lane.b32.xlu0 %v1178, 116
        %v1186 = vpop.permute.xlu0 %1185
        %1187 = vrot.lane.b32.xlu0 %v1180, 116
        %v1188 = vpop.permute.xlu0 %1187
        %v1189 = vsel %vm1008, %v1182, %v1184
        %v1190 = vsel %vm1008, %v1186, %v1188
        %v1193 = vadd.f32 %v1148, %v1189
        %v1194 = vadd.f32 %v1149, %v1190
        %v1195 = vld [vmem:[%s332 + $0x3] sm:$0x1]
        %v1196 = vlaneseq
        %v1197 = vshrl.u32 %v1196, 7
        %v1198 = vsub.s32 0, %v1197
        %v1199 = vrot.slane %v1195, %v1198
        %1201 = vrot.lane.b32.xlu0 %v1199, 12
        %v1202 = vpop.permute.xlu0 %1201
        %v1204 = vmul.f32 %v232, %v1202
        %v1205 = vmul.f32 %v376, %v1202
        %v1206 = vmul.f32 %v233, %v1202
        %v1207 = vmul.f32 %v377, %v1202
        %v1208 = vmul.f32 %v234, %v1202
        %v1209 = vmul.f32 %v378, %v1202
        %v1216 = vrot.slane %v1204, 5
        %v1217 = vrot.slane %v1206, 5
        %v1218 = vsel %vm344, %v1216, %v1217
        %v1219 = vrot.slane %v1205, 5
        %v1220 = vrot.slane %v1207, 5
        %v1221 = vsel %vm344, %v1219, %v1220
        %v1222 = vrot.slane %v1208, 5
        %v1223 = vsel %vm344, %v1217, %v1222
        %v1224 = vrot.slane %v1209, 5
        %v1225 = vsel %vm344, %v1220, %v1224
        %1226 = vrot.lane.b32.xlu0 %v1218, 116
        %v1227 = vpop.permute.xlu0 %1226
        %1228 = vrot.lane.b32.xlu0 %v1221, 116
        %v1229 = vpop.permute.xlu0 %1228
        %1230 = vrot.lane.b32.xlu0 %v1223, 116
        %v1231 = vpop.permute.xlu0 %1230
        %1232 = vrot.lane.b32.xlu0 %v1225, 116
        %v1233 = vpop.permute.xlu0 %1232
        %v1234 = vsel %vm1008, %v1227, %v1229
        %v1235 = vsel %vm1008, %v1231, %v1233
        %v1238 = vadd.f32 %v1193, %v1234
        %v1239 = vadd.f32 %v1194, %v1235
        %v1240 = vld [vmem:[%s354 + $0x3] sm:$0x1]
        %v1241 = vlaneseq
        %v1242 = vshrl.u32 %v1241, 7
        %v1243 = vsub.s32 0, %v1242
        %v1244 = vrot.slane %v1240, %v1243
        %1246 = vrot.lane.b32.xlu0 %v1244, 12
        %v1247 = vpop.permute.xlu0 %1246
        %v1249 = vmul.f32 %v232, %v1247
        %v1250 = vmul.f32 %v376, %v1247
        %v1251 = vmul.f32 %v233, %v1247
        %v1252 = vmul.f32 %v377, %v1247
        %v1253 = vmul.f32 %v234, %v1247
        %v1254 = vmul.f32 %v378, %v1247
        %v1261 = vrot.slane %v1249, 6
        %v1262 = vrot.slane %v1251, 6
        %v1263 = vsel %vm366, %v1261, %v1262
        %v1264 = vrot.slane %v1250, 6
        %v1265 = vrot.slane %v1252, 6
        %v1266 = vsel %vm366, %v1264, %v1265
        %v1267 = vrot.slane %v1253, 6
        %v1268 = vsel %vm366, %v1262, %v1267
        %v1269 = vrot.slane %v1254, 6
        %v1270 = vsel %vm366, %v1265, %v1269
        %1271 = vrot.lane.b32.xlu0 %v1263, 116
        %v1272 = vpop.permute.xlu0 %1271
        %1273 = vrot.lane.b32.xlu0 %v1266, 116
        %v1274 = vpop.permute.xlu0 %1273
        %1275 = vrot.lane.b32.xlu0 %v1268, 116
        %v1276 = vpop.permute.xlu0 %1275
        %1277 = vrot.lane.b32.xlu0 %v1270, 116
        %v1278 = vpop.permute.xlu0 %1277
        %v1279 = vsel %vm1008, %v1272, %v1274
        %v1280 = vsel %vm1008, %v1276, %v1278
        %v1283 = vadd.f32 %v1238, %v1279
        %v1284 = vadd.f32 %v1239, %v1280
        %v1285 = vld [vmem:[#allocation5 + $0x4] sm:$0x1]
        %v1286 = vlaneseq
        %v1287 = vshrl.u32 %v1286, 7
        %v1288 = vsub.s32 0, %v1287
        %v1289 = vrot.slane %v1285, %v1288
        %1291 = vrot.lane.b32.xlu0 %v1289, 16
        %v1292 = vpop.permute.xlu0 %1291
        %v1294 = vmul.f32 %v232, %v1292
        %v1295 = vmul.f32 %v376, %v1292
        %v1296 = vmul.f32 %v233, %v1292
        %v1297 = vmul.f32 %v377, %v1292
        %1302 = vrot.lane.b32.xlu0 %v1294, 112
        %v1303 = vpop.permute.xlu0 %1302
        %1304 = vrot.lane.b32.xlu0 %v1295, 112
        %v1305 = vpop.permute.xlu0 %1304
        %1306 = vrot.lane.b32.xlu0 %v1296, 112
        %v1307 = vpop.permute.xlu0 %1306
        %1308 = vrot.lane.b32.xlu0 %v1297, 112
        %v1309 = vpop.permute.xlu0 %1308
        %vm1310 = vcmask 916480
        %v1311 = vsel %vm1310, %v1303, %v1305
        %v1312 = vsel %vm1310, %v1307, %v1309
        %v1315 = vadd.f32 %v1283, %v1311
        %v1316 = vadd.f32 %v1284, %v1312
        %v1317 = vld [vmem:[%s244 + $0x4] sm:$0x1]
        %v1318 = vlaneseq
        %v1319 = vshrl.u32 %v1318, 7
        %v1320 = vsub.s32 0, %v1319
        %v1321 = vrot.slane %v1317, %v1320
        %1323 = vrot.lane.b32.xlu0 %v1321, 16
        %v1324 = vpop.permute.xlu0 %1323
        %v1326 = vmul.f32 %v232, %v1324
        %v1327 = vmul.f32 %v376, %v1324
        %v1328 = vmul.f32 %v233, %v1324
        %v1329 = vmul.f32 %v377, %v1324
        %v1330 = vmul.f32 %v234, %v1324
        %v1331 = vmul.f32 %v378, %v1324
        %v1338 = vrot.slane %v1326, 1
        %v1339 = vrot.slane %v1328, 1
        %v1340 = vsel %vm256, %v1338, %v1339
        %v1341 = vrot.slane %v1327, 1
        %v1342 = vrot.slane %v1329, 1
        %v1343 = vsel %vm256, %v1341, %v1342
        %v1344 = vrot.slane %v1330, 1
        %v1345 = vsel %vm256, %v1339, %v1344
        %v1346 = vrot.slane %v1331, 1
        %v1347 = vsel %vm256, %v1342, %v1346
        %1348 = vrot.lane.b32.xlu0 %v1340, 112
        %v1349 = vpop.permute.xlu0 %1348
        %1350 = vrot.lane.b32.xlu0 %v1343, 112
        %v1351 = vpop.permute.xlu0 %1350
        %1352 = vrot.lane.b32.xlu0 %v1345, 112
        %v1353 = vpop.permute.xlu0 %1352
        %1354 = vrot.lane.b32.xlu0 %v1347, 112
        %v1355 = vpop.permute.xlu0 %1354
        %v1356 = vsel %vm1310, %v1349, %v1351
        %v1357 = vsel %vm1310, %v1353, %v1355
        %v1360 = vadd.f32 %v1315, %v1356
        %v1361 = vadd.f32 %v1316, %v1357
        %v1362 = vld [vmem:[%s266 + $0x4] sm:$0x1]
        %v1363 = vlaneseq
        %v1364 = vshrl.u32 %v1363, 7
        %v1365 = vsub.s32 0, %v1364
        %v1366 = vrot.slane %v1362, %v1365
        %1368 = vrot.lane.b32.xlu0 %v1366, 16
        %v1369 = vpop.permute.xlu0 %1368
        %v1371 = vmul.f32 %v232, %v1369
        %v1372 = vmul.f32 %v376, %v1369
        %v1373 = vmul.f32 %v233, %v1369
        %v1374 = vmul.f32 %v377, %v1369
        %v1375 = vmul.f32 %v234, %v1369
        %v1376 = vmul.f32 %v378, %v1369
        %v1383 = vrot.slane %v1371, 2
        %v1384 = vrot.slane %v1373, 2
        %v1385 = vsel %vm278, %v1383, %v1384
        %v1386 = vrot.slane %v1372, 2
        %v1387 = vrot.slane %v1374, 2
        %v1388 = vsel %vm278, %v1386, %v1387
        %v1389 = vrot.slane %v1375, 2
        %v1390 = vsel %vm278, %v1384, %v1389
        %v1391 = vrot.slane %v1376, 2
        %v1392 = vsel %vm278, %v1387, %v1391
        %1393 = vrot.lane.b32.xlu0 %v1385, 112
        %v1394 = vpop.permute.xlu0 %1393
        %1395 = vrot.lane.b32.xlu0 %v1388, 112
        %v1396 = vpop.permute.xlu0 %1395
        %1397 = vrot.lane.b32.xlu0 %v1390, 112
        %v1398 = vpop.permute.xlu0 %1397
        %1399 = vrot.lane.b32.xlu0 %v1392, 112
        %v1400 = vpop.permute.xlu0 %1399
        %v1401 = vsel %vm1310, %v1394, %v1396
        %v1402 = vsel %vm1310, %v1398, %v1400
        %v1405 = vadd.f32 %v1360, %v1401
        %v1406 = vadd.f32 %v1361, %v1402
        %v1407 = vld [vmem:[%s288 + $0x4] sm:$0x1]
        %v1408 = vlaneseq
        %v1409 = vshrl.u32 %v1408, 7
        %v1410 = vsub.s32 0, %v1409
        %v1411 = vrot.slane %v1407, %v1410
        %1413 = vrot.lane.b32.xlu0 %v1411, 16
        %v1414 = vpop.permute.xlu0 %1413
        %v1416 = vmul.f32 %v232, %v1414
        %v1417 = vmul.f32 %v376, %v1414
        %v1418 = vmul.f32 %v233, %v1414
        %v1419 = vmul.f32 %v377, %v1414
        %v1420 = vmul.f32 %v234, %v1414
        %v1421 = vmul.f32 %v378, %v1414
        %v1428 = vrot.slane %v1416, 3
        %v1429 = vrot.slane %v1418, 3
        %v1430 = vsel %vm300, %v1428, %v1429
        %v1431 = vrot.slane %v1417, 3
        %v1432 = vrot.slane %v1419, 3
        %v1433 = vsel %vm300, %v1431, %v1432
        %v1434 = vrot.slane %v1420, 3
        %v1435 = vsel %vm300, %v1429, %v1434
        %v1436 = vrot.slane %v1421, 3
        %v1437 = vsel %vm300, %v1432, %v1436
        %1438 = vrot.lane.b32.xlu0 %v1430, 112
        %v1439 = vpop.permute.xlu0 %1438
        %1440 = vrot.lane.b32.xlu0 %v1433, 112
        %v1441 = vpop.permute.xlu0 %1440
        %1442 = vrot.lane.b32.xlu0 %v1435, 112
        %v1443 = vpop.permute.xlu0 %1442
        %1444 = vrot.lane.b32.xlu0 %v1437, 112
        %v1445 = vpop.permute.xlu0 %1444
        %v1446 = vsel %vm1310, %v1439, %v1441
        %v1447 = vsel %vm1310, %v1443, %v1445
        %v1450 = vadd.f32 %v1405, %v1446
        %v1451 = vadd.f32 %v1406, %v1447
        %v1452 = vld [vmem:[%s310 + $0x4] sm:$0x1]
        %v1453 = vlaneseq
        %v1454 = vshrl.u32 %v1453, 7
        %v1455 = vsub.s32 0, %v1454
        %v1456 = vrot.slane %v1452, %v1455
        %1458 = vrot.lane.b32.xlu0 %v1456, 16
        %v1459 = vpop.permute.xlu0 %1458
        %v1461 = vmul.f32 %v232, %v1459
        %v1462 = vmul.f32 %v376, %v1459
        %v1463 = vmul.f32 %v233, %v1459
        %v1464 = vmul.f32 %v377, %v1459
        %v1465 = vmul.f32 %v234, %v1459
        %v1466 = vmul.f32 %v378, %v1459
        %v1473 = vrot.slane %v1461, 4
        %v1474 = vrot.slane %v1463, 4
        %v1475 = vsel %vm322, %v1473, %v1474
        %v1476 = vrot.slane %v1462, 4
        %v1477 = vrot.slane %v1464, 4
        %v1478 = vsel %vm322, %v1476, %v1477
        %v1479 = vrot.slane %v1465, 4
        %v1480 = vsel %vm322, %v1474, %v1479
        %v1481 = vrot.slane %v1466, 4
        %v1482 = vsel %vm322, %v1477, %v1481
        %1483 = vrot.lane.b32.xlu0 %v1475, 112
        %v1484 = vpop.permute.xlu0 %1483
        %1485 = vrot.lane.b32.xlu0 %v1478, 112
        %v1486 = vpop.permute.xlu0 %1485
        %1487 = vrot.lane.b32.xlu0 %v1480, 112
        %v1488 = vpop.permute.xlu0 %1487
        %1489 = vrot.lane.b32.xlu0 %v1482, 112
        %v1490 = vpop.permute.xlu0 %1489
        %v1491 = vsel %vm1310, %v1484, %v1486
        %v1492 = vsel %vm1310, %v1488, %v1490
        %v1495 = vadd.f32 %v1450, %v1491
        %v1496 = vadd.f32 %v1451, %v1492
        %v1497 = vld [vmem:[%s332 + $0x4] sm:$0x1]
        %v1498 = vlaneseq
        %v1499 = vshrl.u32 %v1498, 7
        %v1500 = vsub.s32 0, %v1499
        %v1501 = vrot.slane %v1497, %v1500
        %1503 = vrot.lane.b32.xlu0 %v1501, 16
        %v1504 = vpop.permute.xlu0 %1503
        %v1506 = vmul.f32 %v232, %v1504
        %v1507 = vmul.f32 %v376, %v1504
        %v1508 = vmul.f32 %v233, %v1504
        %v1509 = vmul.f32 %v377, %v1504
        %v1510 = vmul.f32 %v234, %v1504
        %v1511 = vmul.f32 %v378, %v1504
        %v1518 = vrot.slane %v1506, 5
        %v1519 = vrot.slane %v1508, 5
        %v1520 = vsel %vm344, %v1518, %v1519
        %v1521 = vrot.slane %v1507, 5
        %v1522 = vrot.slane %v1509, 5
        %v1523 = vsel %vm344, %v1521, %v1522
        %v1524 = vrot.slane %v1510, 5
        %v1525 = vsel %vm344, %v1519, %v1524
        %v1526 = vrot.slane %v1511, 5
        %v1527 = vsel %vm344, %v1522, %v1526
        %1528 = vrot.lane.b32.xlu0 %v1520, 112
        %v1529 = vpop.permute.xlu0 %1528
        %1530 = vrot.lane.b32.xlu0 %v1523, 112
        %v1531 = vpop.permute.xlu0 %1530
        %1532 = vrot.lane.b32.xlu0 %v1525, 112
        %v1533 = vpop.permute.xlu0 %1532
        %1534 = vrot.lane.b32.xlu0 %v1527, 112
        %v1535 = vpop.permute.xlu0 %1534
        %v1536 = vsel %vm1310, %v1529, %v1531
        %v1537 = vsel %vm1310, %v1533, %v1535
        %v1540 = vadd.f32 %v1495, %v1536
        %v1541 = vadd.f32 %v1496, %v1537
        %v1542 = vld [vmem:[%s354 + $0x4] sm:$0x1]
        %v1543 = vlaneseq
        %v1544 = vshrl.u32 %v1543, 7
        %v1545 = vsub.s32 0, %v1544
        %v1546 = vrot.slane %v1542, %v1545
        %1548 = vrot.lane.b32.xlu0 %v1546, 16
        %v1549 = vpop.permute.xlu0 %1548
        %v1551 = vmul.f32 %v232, %v1549
        %v1552 = vmul.f32 %v376, %v1549
        %v1553 = vmul.f32 %v233, %v1549
        %v1554 = vmul.f32 %v377, %v1549
        %v1555 = vmul.f32 %v234, %v1549
        %v1556 = vmul.f32 %v378, %v1549
        %v1563 = vrot.slane %v1551, 6
        %v1564 = vrot.slane %v1553, 6
        %v1565 = vsel %vm366, %v1563, %v1564
        %v1566 = vrot.slane %v1552, 6
        %v1567 = vrot.slane %v1554, 6
        %v1568 = vsel %vm366, %v1566, %v1567
        %v1569 = vrot.slane %v1555, 6
        %v1570 = vsel %vm366, %v1564, %v1569
        %v1571 = vrot.slane %v1556, 6
        %v1572 = vsel %vm366, %v1567, %v1571
        %1573 = vrot.lane.b32.xlu0 %v1565, 112
        %v1574 = vpop.permute.xlu0 %1573
        %1575 = vrot.lane.b32.xlu0 %v1568, 112
        %v1576 = vpop.permute.xlu0 %1575
        %1577 = vrot.lane.b32.xlu0 %v1570, 112
        %v1578 = vpop.permute.xlu0 %1577
        %1579 = vrot.lane.b32.xlu0 %v1572, 112
        %v1580 = vpop.permute.xlu0 %1579
        %v1581 = vsel %vm1310, %v1574, %v1576
        %v1582 = vsel %vm1310, %v1578, %v1580
        %v1585 = vadd.f32 %v1540, %v1581
        %v1586 = vadd.f32 %v1541, %v1582
        %v1587 = vld [vmem:[#allocation5 + $0x5] sm:$0x1]
        %v1588 = vlaneseq
        %v1589 = vshrl.u32 %v1588, 7
        %v1590 = vsub.s32 0, %v1589
        %v1591 = vrot.slane %v1587, %v1590
        %1593 = vrot.lane.b32.xlu0 %v1591, 20
        %v1594 = vpop.permute.xlu0 %1593
        %v1596 = vmul.f32 %v232, %v1594
        %v1597 = vmul.f32 %v376, %v1594
        %v1598 = vmul.f32 %v233, %v1594
        %v1599 = vmul.f32 %v377, %v1594
        %1604 = vrot.lane.b32.xlu0 %v1596, 108
        %v1605 = vpop.permute.xlu0 %1604
        %1606 = vrot.lane.b32.xlu0 %v1597, 108
        %v1607 = vpop.permute.xlu0 %1606
        %1608 = vrot.lane.b32.xlu0 %v1598, 108
        %v1609 = vpop.permute.xlu0 %1608
        %1610 = vrot.lane.b32.xlu0 %v1599, 108
        %v1611 = vpop.permute.xlu0 %1610
        %vm1612 = vcmask 883712
        %v1613 = vsel %vm1612, %v1605, %v1607
        %v1614 = vsel %vm1612, %v1609, %v1611
        %v1617 = vadd.f32 %v1585, %v1613
        %v1618 = vadd.f32 %v1586, %v1614
        %v1619 = vld [vmem:[%s244 + $0x5] sm:$0x1]
        %v1620 = vlaneseq
        %v1621 = vshrl.u32 %v1620, 7
        %v1622 = vsub.s32 0, %v1621
        %v1623 = vrot.slane %v1619, %v1622
        %1625 = vrot.lane.b32.xlu0 %v1623, 20
        %v1626 = vpop.permute.xlu0 %1625
        %v1628 = vmul.f32 %v232, %v1626
        %v1629 = vmul.f32 %v376, %v1626
        %v1630 = vmul.f32 %v233, %v1626
        %v1631 = vmul.f32 %v377, %v1626
        %v1632 = vmul.f32 %v234, %v1626
        %v1633 = vmul.f32 %v378, %v1626
        %v1640 = vrot.slane %v1628, 1
        %v1641 = vrot.slane %v1630, 1
        %v1642 = vsel %vm256, %v1640, %v1641
        %v1643 = vrot.slane %v1629, 1
        %v1644 = vrot.slane %v1631, 1
        %v1645 = vsel %vm256, %v1643, %v1644
        %v1646 = vrot.slane %v1632, 1
        %v1647 = vsel %vm256, %v1641, %v1646
        %v1648 = vrot.slane %v1633, 1
        %v1649 = vsel %vm256, %v1644, %v1648
        %1650 = vrot.lane.b32.xlu0 %v1642, 108
        %v1651 = vpop.permute.xlu0 %1650
        %1652 = vrot.lane.b32.xlu0 %v1645, 108
        %v1653 = vpop.permute.xlu0 %1652
        %1654 = vrot.lane.b32.xlu0 %v1647, 108
        %v1655 = vpop.permute.xlu0 %1654
        %1656 = vrot.lane.b32.xlu0 %v1649, 108
        %v1657 = vpop.permute.xlu0 %1656
        %v1658 = vsel %vm1612, %v1651, %v1653
        %v1659 = vsel %vm1612, %v1655, %v1657
        %v1662 = vadd.f32 %v1617, %v1658
        %v1663 = vadd.f32 %v1618, %v1659
        %v1664 = vld [vmem:[%s266 + $0x5] sm:$0x1]
        %v1665 = vlaneseq
        %v1666 = vshrl.u32 %v1665, 7
        %v1667 = vsub.s32 0, %v1666
        %v1668 = vrot.slane %v1664, %v1667
        %1670 = vrot.lane.b32.xlu0 %v1668, 20
        %v1671 = vpop.permute.xlu0 %1670
        %v1673 = vmul.f32 %v232, %v1671
        %v1674 = vmul.f32 %v376, %v1671
        %v1675 = vmul.f32 %v233, %v1671
        %v1676 = vmul.f32 %v377, %v1671
        %v1677 = vmul.f32 %v234, %v1671
        %v1678 = vmul.f32 %v378, %v1671
        %v1685 = vrot.slane %v1673, 2
        %v1686 = vrot.slane %v1675, 2
        %v1687 = vsel %vm278, %v1685, %v1686
        %v1688 = vrot.slane %v1674, 2
        %v1689 = vrot.slane %v1676, 2
        %v1690 = vsel %vm278, %v1688, %v1689
        %v1691 = vrot.slane %v1677, 2
        %v1692 = vsel %vm278, %v1686, %v1691
        %v1693 = vrot.slane %v1678, 2
        %v1694 = vsel %vm278, %v1689, %v1693
        %1695 = vrot.lane.b32.xlu0 %v1687, 108
        %v1696 = vpop.permute.xlu0 %1695
        %1697 = vrot.lane.b32.xlu0 %v1690, 108
        %v1698 = vpop.permute.xlu0 %1697
        %1699 = vrot.lane.b32.xlu0 %v1692, 108
        %v1700 = vpop.permute.xlu0 %1699
        %1701 = vrot.lane.b32.xlu0 %v1694, 108
        %v1702 = vpop.permute.xlu0 %1701
        %v1703 = vsel %vm1612, %v1696, %v1698
        %v1704 = vsel %vm1612, %v1700, %v1702
        %v1707 = vadd.f32 %v1662, %v1703
        %v1708 = vadd.f32 %v1663, %v1704
        %v1709 = vld [vmem:[%s288 + $0x5] sm:$0x1]
        %v1710 = vlaneseq
        %v1711 = vshrl.u32 %v1710, 7
        %v1712 = vsub.s32 0, %v1711
        %v1713 = vrot.slane %v1709, %v1712
        %1715 = vrot.lane.b32.xlu0 %v1713, 20
        %v1716 = vpop.permute.xlu0 %1715
        %v1718 = vmul.f32 %v232, %v1716
        %v1719 = vmul.f32 %v376, %v1716
        %v1720 = vmul.f32 %v233, %v1716
        %v1721 = vmul.f32 %v377, %v1716
        %v1722 = vmul.f32 %v234, %v1716
        %v1723 = vmul.f32 %v378, %v1716
        %v1730 = vrot.slane %v1718, 3
        %v1731 = vrot.slane %v1720, 3
        %v1732 = vsel %vm300, %v1730, %v1731
        %v1733 = vrot.slane %v1719, 3
        %v1734 = vrot.slane %v1721, 3
        %v1735 = vsel %vm300, %v1733, %v1734
        %v1736 = vrot.slane %v1722, 3
        %v1737 = vsel %vm300, %v1731, %v1736
        %v1738 = vrot.slane %v1723, 3
        %v1739 = vsel %vm300, %v1734, %v1738
        %1740 = vrot.lane.b32.xlu0 %v1732, 108
        %v1741 = vpop.permute.xlu0 %1740
        %1742 = vrot.lane.b32.xlu0 %v1735, 108
        %v1743 = vpop.permute.xlu0 %1742
        %1744 = vrot.lane.b32.xlu0 %v1737, 108
        %v1745 = vpop.permute.xlu0 %1744
        %1746 = vrot.lane.b32.xlu0 %v1739, 108
        %v1747 = vpop.permute.xlu0 %1746
        %v1748 = vsel %vm1612, %v1741, %v1743
        %v1749 = vsel %vm1612, %v1745, %v1747
        %v1752 = vadd.f32 %v1707, %v1748
        %v1753 = vadd.f32 %v1708, %v1749
        %v1754 = vld [vmem:[%s310 + $0x5] sm:$0x1]
        %v1755 = vlaneseq
        %v1756 = vshrl.u32 %v1755, 7
        %v1757 = vsub.s32 0, %v1756
        %v1758 = vrot.slane %v1754, %v1757
        %1760 = vrot.lane.b32.xlu0 %v1758, 20
        %v1761 = vpop.permute.xlu0 %1760
        %v1763 = vmul.f32 %v232, %v1761
        %v1764 = vmul.f32 %v376, %v1761
        %v1765 = vmul.f32 %v233, %v1761
        %v1766 = vmul.f32 %v377, %v1761
        %v1767 = vmul.f32 %v234, %v1761
        %v1768 = vmul.f32 %v378, %v1761
        %v1775 = vrot.slane %v1763, 4
        %v1776 = vrot.slane %v1765, 4
        %v1777 = vsel %vm322, %v1775, %v1776
        %v1778 = vrot.slane %v1764, 4
        %v1779 = vrot.slane %v1766, 4
        %v1780 = vsel %vm322, %v1778, %v1779
        %v1781 = vrot.slane %v1767, 4
        %v1782 = vsel %vm322, %v1776, %v1781
        %v1783 = vrot.slane %v1768, 4
        %v1784 = vsel %vm322, %v1779, %v1783
        %1785 = vrot.lane.b32.xlu0 %v1777, 108
        %v1786 = vpop.permute.xlu0 %1785
        %1787 = vrot.lane.b32.xlu0 %v1780, 108
        %v1788 = vpop.permute.xlu0 %1787
        %1789 = vrot.lane.b32.xlu0 %v1782, 108
        %v1790 = vpop.permute.xlu0 %1789
        %1791 = vrot.lane.b32.xlu0 %v1784, 108
        %v1792 = vpop.permute.xlu0 %1791
        %v1793 = vsel %vm1612, %v1786, %v1788
        %v1794 = vsel %vm1612, %v1790, %v1792
        %v1797 = vadd.f32 %v1752, %v1793
        %v1798 = vadd.f32 %v1753, %v1794
        %v1799 = vld [vmem:[%s332 + $0x5] sm:$0x1]
        %v1800 = vlaneseq
        %v1801 = vshrl.u32 %v1800, 7
        %v1802 = vsub.s32 0, %v1801
        %v1803 = vrot.slane %v1799, %v1802
        %1805 = vrot.lane.b32.xlu0 %v1803, 20
        %v1806 = vpop.permute.xlu0 %1805
        %v1808 = vmul.f32 %v232, %v1806
        %v1809 = vmul.f32 %v376, %v1806
        %v1810 = vmul.f32 %v233, %v1806
        %v1811 = vmul.f32 %v377, %v1806
        %v1812 = vmul.f32 %v234, %v1806
        %v1813 = vmul.f32 %v378, %v1806
        %v1820 = vrot.slane %v1808, 5
        %v1821 = vrot.slane %v1810, 5
        %v1822 = vsel %vm344, %v1820, %v1821
        %v1823 = vrot.slane %v1809, 5
        %v1824 = vrot.slane %v1811, 5
        %v1825 = vsel %vm344, %v1823, %v1824
        %v1826 = vrot.slane %v1812, 5
        %v1827 = vsel %vm344, %v1821, %v1826
        %v1828 = vrot.slane %v1813, 5
        %v1829 = vsel %vm344, %v1824, %v1828
        %1830 = vrot.lane.b32.xlu0 %v1822, 108
        %v1831 = vpop.permute.xlu0 %1830
        %1832 = vrot.lane.b32.xlu0 %v1825, 108
        %v1833 = vpop.permute.xlu0 %1832
        %1834 = vrot.lane.b32.xlu0 %v1827, 108
        %v1835 = vpop.permute.xlu0 %1834
        %1836 = vrot.lane.b32.xlu0 %v1829, 108
        %v1837 = vpop.permute.xlu0 %1836
        %v1838 = vsel %vm1612, %v1831, %v1833
        %v1839 = vsel %vm1612, %v1835, %v1837
        %v1842 = vadd.f32 %v1797, %v1838
        %v1843 = vadd.f32 %v1798, %v1839
        %v1844 = vld [vmem:[%s354 + $0x5] sm:$0x1]
        %v1845 = vlaneseq
        %v1846 = vshrl.u32 %v1845, 7
        %v1847 = vsub.s32 0, %v1846
        %v1848 = vrot.slane %v1844, %v1847
        %1850 = vrot.lane.b32.xlu0 %v1848, 20
        %v1851 = vpop.permute.xlu0 %1850
        %v1853 = vmul.f32 %v232, %v1851
        %v1854 = vmul.f32 %v376, %v1851
        %v1855 = vmul.f32 %v233, %v1851
        %v1856 = vmul.f32 %v377, %v1851
        %v1857 = vmul.f32 %v234, %v1851
        %v1858 = vmul.f32 %v378, %v1851
        %v1865 = vrot.slane %v1853, 6
        %v1866 = vrot.slane %v1855, 6
        %v1867 = vsel %vm366, %v1865, %v1866
        %v1868 = vrot.slane %v1854, 6
        %v1869 = vrot.slane %v1856, 6
        %v1870 = vsel %vm366, %v1868, %v1869
        %v1871 = vrot.slane %v1857, 6
        %v1872 = vsel %vm366, %v1866, %v1871
        %v1873 = vrot.slane %v1858, 6
        %v1874 = vsel %vm366, %v1869, %v1873
        %1875 = vrot.lane.b32.xlu0 %v1867, 108
        %v1876 = vpop.permute.xlu0 %1875
        %1877 = vrot.lane.b32.xlu0 %v1870, 108
        %v1878 = vpop.permute.xlu0 %1877
        %1879 = vrot.lane.b32.xlu0 %v1872, 108
        %v1880 = vpop.permute.xlu0 %1879
        %1881 = vrot.lane.b32.xlu0 %v1874, 108
        %v1882 = vpop.permute.xlu0 %1881
        %v1883 = vsel %vm1612, %v1876, %v1878
        %v1884 = vsel %vm1612, %v1880, %v1882
        %v1887 = vadd.f32 %v1842, %v1883
        %v1888 = vadd.f32 %v1843, %v1884
        %v1889 = vld [vmem:[#allocation5 + $0x6] sm:$0x1]
        %v1890 = vlaneseq
        %v1891 = vshrl.u32 %v1890, 7
        %v1892 = vsub.s32 0, %v1891
        %v1893 = vrot.slane %v1889, %v1892
        %1895 = vrot.lane.b32.xlu0 %v1893, 24
        %v1896 = vpop.permute.xlu0 %1895
        %v1898 = vmul.f32 %v232, %v1896
        %v1899 = vmul.f32 %v376, %v1896
        %v1900 = vmul.f32 %v233, %v1896
        %v1901 = vmul.f32 %v377, %v1896
        %1906 = vrot.lane.b32.xlu0 %v1898, 104
        %v1907 = vpop.permute.xlu0 %1906
        %1908 = vrot.lane.b32.xlu0 %v1899, 104
        %v1909 = vpop.permute.xlu0 %1908
        %1910 = vrot.lane.b32.xlu0 %v1900, 104
        %v1911 = vpop.permute.xlu0 %1910
        %1912 = vrot.lane.b32.xlu0 %v1901, 104
        %v1913 = vpop.permute.xlu0 %1912
        %vm1914 = vcmask 850944
        %v1915 = vsel %vm1914, %v1907, %v1909
        %v1916 = vsel %vm1914, %v1911, %v1913
        %v1919 = vadd.f32 %v1887, %v1915
        %v1920 = vadd.f32 %v1888, %v1916
        %v1921 = vld [vmem:[%s244 + $0x6] sm:$0x1]
        %v1922 = vlaneseq
        %v1923 = vshrl.u32 %v1922, 7
        %v1924 = vsub.s32 0, %v1923
        %v1925 = vrot.slane %v1921, %v1924
        %1927 = vrot.lane.b32.xlu0 %v1925, 24
        %v1928 = vpop.permute.xlu0 %1927
        %v1930 = vmul.f32 %v232, %v1928
        %v1931 = vmul.f32 %v376, %v1928
        %v1932 = vmul.f32 %v233, %v1928
        %v1933 = vmul.f32 %v377, %v1928
        %v1934 = vmul.f32 %v234, %v1928
        %v1935 = vmul.f32 %v378, %v1928
        %v1942 = vrot.slane %v1930, 1
        %v1943 = vrot.slane %v1932, 1
        %v1944 = vsel %vm256, %v1942, %v1943
        %v1945 = vrot.slane %v1931, 1
        %v1946 = vrot.slane %v1933, 1
        %v1947 = vsel %vm256, %v1945, %v1946
        %v1948 = vrot.slane %v1934, 1
        %v1949 = vsel %vm256, %v1943, %v1948
        %v1950 = vrot.slane %v1935, 1
        %v1951 = vsel %vm256, %v1946, %v1950
        %1952 = vrot.lane.b32.xlu0 %v1944, 104
        %v1953 = vpop.permute.xlu0 %1952
        %1954 = vrot.lane.b32.xlu0 %v1947, 104
        %v1955 = vpop.permute.xlu0 %1954
        %1956 = vrot.lane.b32.xlu0 %v1949, 104
        %v1957 = vpop.permute.xlu0 %1956
        %1958 = vrot.lane.b32.xlu0 %v1951, 104
        %v1959 = vpop.permute.xlu0 %1958
        %v1960 = vsel %vm1914, %v1953, %v1955
        %v1961 = vsel %vm1914, %v1957, %v1959
        %v1964 = vadd.f32 %v1919, %v1960
        %v1965 = vadd.f32 %v1920, %v1961
        %v1966 = vld [vmem:[%s266 + $0x6] sm:$0x1]
        %v1967 = vlaneseq
        %v1968 = vshrl.u32 %v1967, 7
        %v1969 = vsub.s32 0, %v1968
        %v1970 = vrot.slane %v1966, %v1969
        %1972 = vrot.lane.b32.xlu0 %v1970, 24
        %v1973 = vpop.permute.xlu0 %1972
        %v1975 = vmul.f32 %v232, %v1973
        %v1976 = vmul.f32 %v376, %v1973
        %v1977 = vmul.f32 %v233, %v1973
        %v1978 = vmul.f32 %v377, %v1973
        %v1979 = vmul.f32 %v234, %v1973
        %v1980 = vmul.f32 %v378, %v1973
        %v1987 = vrot.slane %v1975, 2
        %v1988 = vrot.slane %v1977, 2
        %v1989 = vsel %vm278, %v1987, %v1988
        %v1990 = vrot.slane %v1976, 2
        %v1991 = vrot.slane %v1978, 2
        %v1992 = vsel %vm278, %v1990, %v1991
        %v1993 = vrot.slane %v1979, 2
        %v1994 = vsel %vm278, %v1988, %v1993
        %v1995 = vrot.slane %v1980, 2
        %v1996 = vsel %vm278, %v1991, %v1995
        %1997 = vrot.lane.b32.xlu0 %v1989, 104
        %v1998 = vpop.permute.xlu0 %1997
        %1999 = vrot.lane.b32.xlu0 %v1992, 104
        %v2000 = vpop.permute.xlu0 %1999
        %2001 = vrot.lane.b32.xlu0 %v1994, 104
        %v2002 = vpop.permute.xlu0 %2001
        %2003 = vrot.lane.b32.xlu0 %v1996, 104
        %v2004 = vpop.permute.xlu0 %2003
        %v2005 = vsel %vm1914, %v1998, %v2000
        %v2006 = vsel %vm1914, %v2002, %v2004
        %v2009 = vadd.f32 %v1964, %v2005
        %v2010 = vadd.f32 %v1965, %v2006
        %v2011 = vld [vmem:[%s288 + $0x6] sm:$0x1]
        %v2012 = vlaneseq
        %v2013 = vshrl.u32 %v2012, 7
        %v2014 = vsub.s32 0, %v2013
        %v2015 = vrot.slane %v2011, %v2014
        %2017 = vrot.lane.b32.xlu0 %v2015, 24
        %v2018 = vpop.permute.xlu0 %2017
        %v2020 = vmul.f32 %v232, %v2018
        %v2021 = vmul.f32 %v376, %v2018
        %v2022 = vmul.f32 %v233, %v2018
        %v2023 = vmul.f32 %v377, %v2018
        %v2024 = vmul.f32 %v234, %v2018
        %v2025 = vmul.f32 %v378, %v2018
        %v2032 = vrot.slane %v2020, 3
        %v2033 = vrot.slane %v2022, 3
        %v2034 = vsel %vm300, %v2032, %v2033
        %v2035 = vrot.slane %v2021, 3
        %v2036 = vrot.slane %v2023, 3
        %v2037 = vsel %vm300, %v2035, %v2036
        %v2038 = vrot.slane %v2024, 3
        %v2039 = vsel %vm300, %v2033, %v2038
        %v2040 = vrot.slane %v2025, 3
        %v2041 = vsel %vm300, %v2036, %v2040
        %2042 = vrot.lane.b32.xlu0 %v2034, 104
        %v2043 = vpop.permute.xlu0 %2042
        %2044 = vrot.lane.b32.xlu0 %v2037, 104
        %v2045 = vpop.permute.xlu0 %2044
        %2046 = vrot.lane.b32.xlu0 %v2039, 104
        %v2047 = vpop.permute.xlu0 %2046
        %2048 = vrot.lane.b32.xlu0 %v2041, 104
        %v2049 = vpop.permute.xlu0 %2048
        %v2050 = vsel %vm1914, %v2043, %v2045
        %v2051 = vsel %vm1914, %v2047, %v2049
        %v2054 = vadd.f32 %v2009, %v2050
        %v2055 = vadd.f32 %v2010, %v2051
        %v2056 = vld [vmem:[%s310 + $0x6] sm:$0x1]
        %v2057 = vlaneseq
        %v2058 = vshrl.u32 %v2057, 7
        %v2059 = vsub.s32 0, %v2058
        %v2060 = vrot.slane %v2056, %v2059
        %2062 = vrot.lane.b32.xlu0 %v2060, 24
        %v2063 = vpop.permute.xlu0 %2062
        %v2065 = vmul.f32 %v232, %v2063
        %v2066 = vmul.f32 %v376, %v2063
        %v2067 = vmul.f32 %v233, %v2063
        %v2068 = vmul.f32 %v377, %v2063
        %v2069 = vmul.f32 %v234, %v2063
        %v2070 = vmul.f32 %v378, %v2063
        %v2077 = vrot.slane %v2065, 4
        %v2078 = vrot.slane %v2067, 4
        %v2079 = vsel %vm322, %v2077, %v2078
        %v2080 = vrot.slane %v2066, 4
        %v2081 = vrot.slane %v2068, 4
        %v2082 = vsel %vm322, %v2080, %v2081
        %v2083 = vrot.slane %v2069, 4
        %v2084 = vsel %vm322, %v2078, %v2083
        %v2085 = vrot.slane %v2070, 4
        %v2086 = vsel %vm322, %v2081, %v2085
        %2087 = vrot.lane.b32.xlu0 %v2079, 104
        %v2088 = vpop.permute.xlu0 %2087
        %2089 = vrot.lane.b32.xlu0 %v2082, 104
        %v2090 = vpop.permute.xlu0 %2089
        %2091 = vrot.lane.b32.xlu0 %v2084, 104
        %v2092 = vpop.permute.xlu0 %2091
        %2093 = vrot.lane.b32.xlu0 %v2086, 104
        %v2094 = vpop.permute.xlu0 %2093
        %v2095 = vsel %vm1914, %v2088, %v2090
        %v2096 = vsel %vm1914, %v2092, %v2094
        %v2099 = vadd.f32 %v2054, %v2095
        %v2100 = vadd.f32 %v2055, %v2096
        %v2101 = vld [vmem:[%s332 + $0x6] sm:$0x1]
        %v2102 = vlaneseq
        %v2103 = vshrl.u32 %v2102, 7
        %v2104 = vsub.s32 0, %v2103
        %v2105 = vrot.slane %v2101, %v2104
        %2107 = vrot.lane.b32.xlu0 %v2105, 24
        %v2108 = vpop.permute.xlu0 %2107
        %v2110 = vmul.f32 %v232, %v2108
        %v2111 = vmul.f32 %v376, %v2108
        %v2112 = vmul.f32 %v233, %v2108
        %v2113 = vmul.f32 %v377, %v2108
        %v2114 = vmul.f32 %v234, %v2108
        %v2115 = vmul.f32 %v378, %v2108
        %v2122 = vrot.slane %v2110, 5
        %v2123 = vrot.slane %v2112, 5
        %v2124 = vsel %vm344, %v2122, %v2123
        %v2125 = vrot.slane %v2111, 5
        %v2126 = vrot.slane %v2113, 5
        %v2127 = vsel %vm344, %v2125, %v2126
        %v2128 = vrot.slane %v2114, 5
        %v2129 = vsel %vm344, %v2123, %v2128
        %v2130 = vrot.slane %v2115, 5
        %v2131 = vsel %vm344, %v2126, %v2130
        %2132 = vrot.lane.b32.xlu0 %v2124, 104
        %v2133 = vpop.permute.xlu0 %2132
        %2134 = vrot.lane.b32.xlu0 %v2127, 104
        %v2135 = vpop.permute.xlu0 %2134
        %2136 = vrot.lane.b32.xlu0 %v2129, 104
        %v2137 = vpop.permute.xlu0 %2136
        %2138 = vrot.lane.b32.xlu0 %v2131, 104
        %v2139 = vpop.permute.xlu0 %2138
        %v2140 = vsel %vm1914, %v2133, %v2135
        %v2141 = vsel %vm1914, %v2137, %v2139
        %v2144 = vadd.f32 %v2099, %v2140
        %v2145 = vadd.f32 %v2100, %v2141
        %v2146 = vld [vmem:[%s354 + $0x6] sm:$0x1]
        %v2147 = vlaneseq
        %v2148 = vshrl.u32 %v2147, 7
        %v2149 = vsub.s32 0, %v2148
        %v2150 = vrot.slane %v2146, %v2149
        %2152 = vrot.lane.b32.xlu0 %v2150, 24
        %v2153 = vpop.permute.xlu0 %2152
        %v2155 = vmul.f32 %v232, %v2153
        %v2156 = vmul.f32 %v376, %v2153
        %v2157 = vmul.f32 %v233, %v2153
        %v2158 = vmul.f32 %v377, %v2153
        %v2159 = vmul.f32 %v234, %v2153
        %v2160 = vmul.f32 %v378, %v2153
        %v2167 = vrot.slane %v2155, 6
        %v2168 = vrot.slane %v2157, 6
        %v2169 = vsel %vm366, %v2167, %v2168
        %v2170 = vrot.slane %v2156, 6
        %v2171 = vrot.slane %v2158, 6
        %v2172 = vsel %vm366, %v2170, %v2171
        %v2173 = vrot.slane %v2159, 6
        %v2174 = vsel %vm366, %v2168, %v2173
        %v2175 = vrot.slane %v2160, 6
        %v2176 = vsel %vm366, %v2171, %v2175
        %2177 = vrot.lane.b32.xlu0 %v2169, 104
        %v2178 = vpop.permute.xlu0 %2177
        %2179 = vrot.lane.b32.xlu0 %v2172, 104
        %v2180 = vpop.permute.xlu0 %2179
        %2181 = vrot.lane.b32.xlu0 %v2174, 104
        %v2182 = vpop.permute.xlu0 %2181
        %2183 = vrot.lane.b32.xlu0 %v2176, 104
        %v2184 = vpop.permute.xlu0 %2183
        %v2185 = vsel %vm1914, %v2178, %v2180
        %v2186 = vsel %vm1914, %v2182, %v2184
        %v2189 = vadd.f32 %v2144, %v2185
        %v2190 = vadd.f32 %v2145, %v2186
        %v2191 = vmul.f32 %v2189, 0.5
        %v2192 = vmul.f32 %v2190, 0.5
        %v2193 = vtanh.pop %v2191
        %v2194 = vtanh.pop %v2192
        %v2195 = vmul.f32 %v2193, 0.5
        %v2196 = vmul.f32 %v2194, 0.5
        %v2197 = vadd.f32 %v2195, 0.5
        %v2198 = vadd.f32 %v2196, 0.5
        %v2199 = vmul.f32 %v2189, %v2197
        %v2200 = vmul.f32 %v2190, %v2198
        %2201 = vst [vmem:[%s217] sm:$0xff] %v2199
        %2202 = vst [vmem:[%s217 + $0x8] sm:$0xff] %v2200
        %s2203 = sand.u32 %s111, 1
        %s2204 = scalar_lea.sflag [#allocation4], %s2203
        %s2205 = sand.u32 %s111, 1
        %s2206 = smul.addr %s2205, 16
        %s2207 = scalar_lea.vmem [#allocation7], %s2206
        // Predicated region
        $region41: #{tpu_custom_call.1} parent=31 // pred_check
          %p2208 = pneg %p121
        $region42: #{tpu_custom_call.1} parent=31 // pred_check_branch
          %2210 = sbr.rel (%p2208) target = $region44
        $region43: #{tpu_custom_call.1} parent=31 // pred_region
          %s2211 = smul.u32 2, %s26
          %s2213 = ssub.s32 256, 256
          %2214 = vsyncadd %s2204, %s2213
          %s2215 = smul.addr %s25, 2
          %s2216 = sadd.s32 %s2211, %s2215
          %s2217 = smul.addr %s2216, 128
          %s2218 = scalar_lea.hbm %s3, %s2217
          %s2219 = sshll.u32 %s2207, 4
          %s2220 = int_to_ptr.vmem [resolvable:$true] %s2219
          %2225 = dma.vmem_to_hbm [thread:$0]  %s2220, 256, %s2218, %s2204, 128, 128, 8
        $region44: #{tpu_custom_call.1} parent=31 // pred_fallthru
          _
      $region32: #{tpu_custom_call.1} parent=5 // pred_fallthru
        _
      %p2226 = scmp.le.s32.totalorder 2, %s16
      // Predicated region
      $region45: #{tpu_custom_call.1} parent=5 // pred_check
        %p2227 = pneg %p2226
      $region46: #{tpu_custom_call.1} parent=5 // pred_check_branch
        %2229 = sbr.rel (%p2227) target = $region48
      $region47: #{tpu_custom_call.1} parent=5 // pred_region
        %s2230 = ssub.s32 %s16, 2
        // Predicated region
        $region49: #{tpu_custom_call.1} parent=47 // pred_check
          %p2231 = pneg %p127
        $region50: #{tpu_custom_call.1} parent=47 // pred_check_branch
          %2233 = sbr.rel (%p2231) target = $region52
        $region51: #{tpu_custom_call.1} parent=47 // pred_region
          %s2234 = sand.u32 %s112, 1
          %s2235 = scalar_lea.sflag [#allocation4], %s2234
          %s2236 = sand.u32 %s112, 1
          %s2237 = smul.addr %s2236, 16
          %s2238 = scalar_lea.vmem [#allocation7], %s2237
          %2239 = dma.done %s2235, 256
        $region52: #{tpu_custom_call.1} parent=47 // pred_fallthru
          _
      $region48: #{tpu_custom_call.1} parent=5 // pred_fallthru
        _
    $region6: #{tpu_custom_call.1} parent=1 // loop_footer
      %s20 = sadd.s32 1, %s16
    $region7: #{tpu_custom_call.1} parent=1 // loop_footer_branch
      %15 = sbr.rel target = $region3
    $region8: #{tpu_custom_call.1} parent=1 // loop_exit
      _
    %2240 = vsyncpa [#allocation3], 1
    %s2241 = scalar_lea.sflag [#allocation3], 1
    %2242 = vsyncpa %s2241, 1
    %2243 = vsyncpa [#allocation6], 1
    %2244 = vsyncpa [#allocation4], 1
    %s2245 = scalar_lea.sflag [#allocation4], 1
    %2246 = vsyncpa %s2245, 1

</llo_original>
